<compile_context>
chip_gen: v5e
topology: v5e:2x2
jax: 0.10.0
libtpu: 0.0.40
codegen_flags: <defaults>
</compile_context>

<pallas_src>
import jax
import jax.numpy as jnp
from jax.experimental import pallas as pl
from jax.experimental.pallas import tpu as pltpu

D_IN, H1, H2, D_OUT = 784, 512, 256, 10
N_PAD = 128          # padded logits dim -> lane-dense output (sliced to 10 in wrapper)
TB_TARGET = 1024     # batch-tile target
MIN_TB = 16          # bf16 packs 16 rows per vreg sublane group


def _round_up(a: int, m: int) -> int:
    return ((a + m - 1) // m) * m


def mlp_kernel(x_ref, w1_ref, b1_ref, w2_ref, b2_ref, w3_ref, b3_ref, o_ref):
    # x arrives as f32 straight from HBM; cast to bf16 on the VPU.
    x_bf = x_ref[...].astype(jnp.bfloat16)
    # Layer 1: (TB,784)bf16 @ (784,512)bf16 -> f32 acc, +bias, ReLU
    h1 = jnp.dot(x_bf, w1_ref[...], preferred_element_type=jnp.float32)
    h1 = jnp.maximum(h1 + b1_ref[...], 0.0)
    # Layer 2: (TB,512)bf16 @ (512,256)bf16 -> f32 acc, +bias, ReLU
    h2 = jnp.dot(h1.astype(jnp.bfloat16), w2_ref[...],
                 preferred_element_type=jnp.float32)
    h2 = jnp.maximum(h2 + b2_ref[...], 0.0)
    # Layer 3: (TB,256)bf16 @ (256,128)bf16 -> f32 acc, +bias (N padded 10->128)
    out = jnp.dot(h2.astype(jnp.bfloat16), w3_ref[...],
                  preferred_element_type=jnp.float32)
    o_ref[...] = (out + b3_ref[...]).astype(o_ref.dtype)


def prepare_params(params):
    """One-time weight prep (hoisted out of the per-call path): bf16 weights
    for the MXU, f32 biases, final layer padded 10 -> 128 lanes."""
    w1, b1, w2, b2, w3, b3 = params
    w1_bf = w1.astype(jnp.bfloat16)                                          # (784, 512)
    w2_bf = w2.astype(jnp.bfloat16)                                          # (512, 256)
    w3_bf = jnp.pad(w3, ((0, 0), (0, N_PAD - D_OUT))).astype(jnp.bfloat16)   # (256, 128)
    b3_p = jnp.pad(b3, ((0, 0), (0, N_PAD - D_OUT)))                         # (1, 128) f32
    return (w1_bf, b1, w2_bf, b2, w3_bf, b3_p)


def mlp_forward(x_nchw, prepared):
    """x_nchw: (B,1,28,28) f32.  prepared = prepare_params(params).
    Returns (B, 10) f32 logits."""
    w1_bf, b1, w2_bf, b2, w3_bf, b3_p = prepared
    B = x_nchw.shape[0]
    x2d = x_nchw.reshape(B, -1)            # nn.Flatten (row-major); stays f32

    # Tiny batches: pad rows to 16 so the batch block never exceeds the array.
    B_eff = B
    if B < MIN_TB:
        x2d = jnp.pad(x2d, ((0, MIN_TB - B), (0, 0)))
        B_eff = MIN_TB

    # Batch tile: as large as possible (<= TB_TARGET) while keeping >= 2 grid
    # steps so both v7x TensorCores get work; multiple of 16 rows.  The last
    # grid step may be a partial block (no batch zero-pad copy).
    n_steps = max(2, pl.cdiv(B_eff, TB_TARGET))
    TB = min(TB_TARGET, _round_up(pl.cdiv(B_eff, n_steps), MIN_TB))
    grid = (pl.cdiv(B_eff, TB),)

    flops = 2 * B_eff * (D_IN * H1 + H1 * H2 + H2 * N_PAD)
    bytes_accessed = (
        x2d.size * 4
        + (w1_bf.size + w2_bf.size + w3_bf.size) * 2
        + (b1.size + b2.size + b3_p.size) * 4
        + B_eff * N_PAD * 2
    )

    out = pl.pallas_call(
        mlp_kernel,
        out_shape=jax.ShapeDtypeStruct((B_eff, N_PAD), jnp.bfloat16),
        grid=grid,
        in_specs=[
            pl.BlockSpec((TB, D_IN), lambda i: (i, 0)),   # x tile (pipelined, f32)
            pl.BlockSpec((D_IN, H1), lambda i: (0, 0)),   # VMEM-resident weights
            pl.BlockSpec((1, H1), lambda i: (0, 0)),
            pl.BlockSpec((H1, H2), lambda i: (0, 0)),
            pl.BlockSpec((1, H2), lambda i: (0, 0)),
            pl.BlockSpec((H2, N_PAD), lambda i: (0, 0)),
            pl.BlockSpec((1, N_PAD), lambda i: (0, 0)),
        ],
        out_specs=pl.BlockSpec((TB, N_PAD), lambda i: (i, 0)),
        compiler_params=pltpu.CompilerParams(
            dimension_semantics=("parallel",),
            vmem_limit_bytes=48 * 1024 * 1024,   # clears v5e's 16 MiB scoped default
        ),
        cost_estimate=pl.CostEstimate(
            flops=flops, transcendentals=0, bytes_accessed=bytes_accessed),
    )(x2d, w1_bf, b1, w2_bf, b2, w3_bf, b3_p)

    return out[:B, :D_OUT].astype(jnp.float32)


def init_params(key):
    """Deterministic init mimicking PyTorch's default Linear init
    (uniform(-1/sqrt(fan_in), 1/sqrt(fan_in)))."""
    dims = [(D_IN, H1), (H1, H2), (H2, D_OUT)]
    params = []
    for (fan_in, fan_out) in dims:
        key, kw, kb = jax.random.split(key, 3)
        bound = 1.0 / jnp.sqrt(jnp.float32(fan_in))
        w = jax.random.uniform(kw, (fan_in, fan_out), jnp.float32, -bound, bound)
        b = jax.random.uniform(kb, (1, fan_out), jnp.float32, -bound, bound)
        params += [w, b]
    return tuple(params)


if __name__ == "__main__":
    key = jax.random.PRNGKey(0)
    key, kx = jax.random.split(key)
    # Small MNIST-like batch: (B=2, C=1, H=28, W=28) — 784 flattened features.
    x = jax.random.normal(kx, (2, 1, 28, 28), jnp.float32)
    params = init_params(key)
    prepared = prepare_params(params)            # one-time weight prep

    out = mlp_forward(x, prepared)
    out = jax.block_until_ready(out)
    assert out.shape == (2, 10)

    # Pure-JAX reference with the same bf16-operand / f32-accumulation recipe
    # as the kernel (bf16 weights/output change results at the ~1e-3 level).
    w1, b1, w2, b2, w3, b3 = params
    x2d = x.reshape(x.shape[0], -1)
    h1 = jnp.maximum(
        jnp.dot(x2d.astype(jnp.bfloat16), w1.astype(jnp.bfloat16),
                preferred_element_type=jnp.float32) + b1, 0.0)
    h2 = jnp.maximum(
        jnp.dot(h1.astype(jnp.bfloat16), w2.astype(jnp.bfloat16),
                preferred_element_type=jnp.float32) + b2, 0.0)
    ref = jnp.dot(h2.astype(jnp.bfloat16), w3.astype(jnp.bfloat16),
                  preferred_element_type=jnp.float32) + b3
    assert jnp.allclose(out, ref, atol=2e-2, rtol=2e-2)

    print("KERNEL_OK")
</pallas_src>

<mosaic_0001>
module attributes {stable_mosaic.version = 11 : i64} {
  func.func @mlp_kernel(%arg0: i32, %arg1: memref<16x784xf32, #tpu.memory_space<vmem>>, %arg2: memref<784x512xbf16, #tpu.memory_space<vmem>>, %arg3: memref<1x512xf32, #tpu.memory_space<vmem>>, %arg4: memref<512x256xbf16, #tpu.memory_space<vmem>>, %arg5: memref<1x256xf32, #tpu.memory_space<vmem>>, %arg6: memref<256x128xbf16, #tpu.memory_space<vmem>>, %arg7: memref<1x128xf32, #tpu.memory_space<vmem>>, %arg8: memref<16x128xbf16, #tpu.memory_space<vmem>>) attributes {dimension_semantics = [#tpu.dimension_semantics<parallel>], iteration_bounds = array<i64: 1>, scalar_prefetch = 0 : i64, scratch_operands = 0 : i64, tpu.core_type = #tpu.core_type<tc>, window_params = [{transform_indices = @transform_0, window_bounds = array<i64: 16, 784>}, {pipeline_mode = #tpu.pipeline_mode<synchronous>, transform_indices = @transform_1, window_bounds = array<i64: 784, 512>}, {pipeline_mode = #tpu.pipeline_mode<synchronous>, transform_indices = @transform_2, window_bounds = array<i64: 1, 512>}, {pipeline_mode = #tpu.pipeline_mode<synchronous>, transform_indices = @transform_3, window_bounds = array<i64: 512, 256>}, {pipeline_mode = #tpu.pipeline_mode<synchronous>, transform_indices = @transform_4, window_bounds = array<i64: 1, 256>}, {pipeline_mode = #tpu.pipeline_mode<synchronous>, transform_indices = @transform_5, window_bounds = array<i64: 256, 128>}, {pipeline_mode = #tpu.pipeline_mode<synchronous>, transform_indices = @transform_6, window_bounds = array<i64: 1, 128>}, {transform_indices = @transform_7, window_bounds = array<i64: 16, 128>}]} {
    %c0 = arith.constant 0 : index
    %c0_0 = arith.constant 0 : index
    %0 = vector.load %arg1[%c0, %c0_0] : memref<16x784xf32, #tpu.memory_space<vmem>>, vector<16x784xf32>
    %1 = arith.truncf %0 : vector<16x784xf32> to vector<16x784xbf16>
    %c0_1 = arith.constant 0 : index
    %c0_2 = arith.constant 0 : index
    %2 = vector.load %arg2[%c0_1, %c0_2] : memref<784x512xbf16, #tpu.memory_space<vmem>>, vector<784x512xbf16>
    %cst = arith.constant dense<0.000000e+00> : vector<16x512xf32>
    %3 = tpu.matmul %1, %2, %cst {dimension_numbers = #tpu.dot_dimension_numbers<[1], [0], [0], [1], [0, 0, 1, 1], [], []>} : vector<16x784xbf16>, vector<784x512xbf16>, vector<16x512xf32> -> vector<16x512xf32>
    %c0_3 = arith.constant 0 : index
    %c0_4 = arith.constant 0 : index
    %4 = vector.load %arg3[%c0_3, %c0_4] : memref<1x512xf32, #tpu.memory_space<vmem>>, vector<1x512xf32>
    %5 = vector.broadcast %4 : vector<1x512xf32> to vector<16x512xf32>
    %6 = arith.addf %3, %5 : vector<16x512xf32>
    %cst_5 = arith.constant 0.000000e+00 : f32
    %7 = vector.broadcast %cst_5 : f32 to vector<16x512xf32>
    %8 = arith.maximumf %6, %7 : vector<16x512xf32>
    %9 = arith.truncf %8 : vector<16x512xf32> to vector<16x512xbf16>
    %c0_6 = arith.constant 0 : index
    %c0_7 = arith.constant 0 : index
    %10 = vector.load %arg4[%c0_6, %c0_7] : memref<512x256xbf16, #tpu.memory_space<vmem>>, vector<512x256xbf16>
    %cst_8 = arith.constant dense<0.000000e+00> : vector<16x256xf32>
    %11 = tpu.matmul %9, %10, %cst_8 {dimension_numbers = #tpu.dot_dimension_numbers<[1], [0], [0], [1], [0, 0, 1, 1], [], []>} : vector<16x512xbf16>, vector<512x256xbf16>, vector<16x256xf32> -> vector<16x256xf32>
    %c0_9 = arith.constant 0 : index
    %c0_10 = arith.constant 0 : index
    %12 = vector.load %arg5[%c0_9, %c0_10] : memref<1x256xf32, #tpu.memory_space<vmem>>, vector<1x256xf32>
    %13 = vector.broadcast %12 : vector<1x256xf32> to vector<16x256xf32>
    %14 = arith.addf %11, %13 : vector<16x256xf32>
    %cst_11 = arith.constant 0.000000e+00 : f32
    %15 = vector.broadcast %cst_11 : f32 to vector<16x256xf32>
    %16 = arith.maximumf %14, %15 : vector<16x256xf32>
    %17 = arith.truncf %16 : vector<16x256xf32> to vector<16x256xbf16>
    %c0_12 = arith.constant 0 : index
    %c0_13 = arith.constant 0 : index
    %18 = vector.load %arg6[%c0_12, %c0_13] : memref<256x128xbf16, #tpu.memory_space<vmem>>, vector<256x128xbf16>
    %cst_14 = arith.constant dense<0.000000e+00> : vector<16x128xf32>
    %19 = tpu.matmul %17, %18, %cst_14 {dimension_numbers = #tpu.dot_dimension_numbers<[1], [0], [0], [1], [0, 0, 1, 1], [], []>} : vector<16x256xbf16>, vector<256x128xbf16>, vector<16x128xf32> -> vector<16x128xf32>
    %c0_15 = arith.constant 0 : index
    %c0_16 = arith.constant 0 : index
    %20 = vector.load %arg7[%c0_15, %c0_16] : memref<1x128xf32, #tpu.memory_space<vmem>>, vector<1x128xf32>
    %21 = vector.broadcast %20 : vector<1x128xf32> to vector<16x128xf32>
    %22 = arith.addf %19, %21 : vector<16x128xf32>
    %23 = arith.truncf %22 : vector<16x128xf32> to vector<16x128xbf16>
    %c0_17 = arith.constant 0 : index
    %c0_18 = arith.constant 0 : index
    %24 = vector.load %arg8[%c0_17, %c0_18] : memref<16x128xbf16, #tpu.memory_space<vmem>>, vector<16x128xbf16>
    tpu.vector_store %arg8[%c0_17, %c0_18], %23 {strides = array<i32>} : memref<16x128xbf16, #tpu.memory_space<vmem>>, vector<16x128xbf16>,
    return
  }
  func.func @transform_0(%arg0: i32) -> (i32, i32) {
    %c0_i32 = arith.constant 0 : i32
    %c0_i32_0 = arith.constant 0 : i32
    return %arg0, %c0_i32 : i32, i32
  }
  func.func @transform_1(%arg0: i32) -> (i32, i32) {
    %c0_i32 = arith.constant 0 : i32
    %c0_i32_0 = arith.constant 0 : i32
    %c0_i32_1 = arith.constant 0 : i32
    return %c0_i32, %c0_i32_0 : i32, i32
  }
  func.func @transform_2(%arg0: i32) -> (i32, i32) {
    %c0_i32 = arith.constant 0 : i32
    %c0_i32_0 = arith.constant 0 : i32
    %c0_i32_1 = arith.constant 0 : i32
    return %c0_i32, %c0_i32_0 : i32, i32
  }
  func.func @transform_3(%arg0: i32) -> (i32, i32) {
    %c0_i32 = arith.constant 0 : i32
    %c0_i32_0 = arith.constant 0 : i32
    %c0_i32_1 = arith.constant 0 : i32
    return %c0_i32, %c0_i32_0 : i32, i32
  }
  func.func @transform_4(%arg0: i32) -> (i32, i32) {
    %c0_i32 = arith.constant 0 : i32
    %c0_i32_0 = arith.constant 0 : i32
    %c0_i32_1 = arith.constant 0 : i32
    return %c0_i32, %c0_i32_0 : i32, i32
  }
  func.func @transform_5(%arg0: i32) -> (i32, i32) {
    %c0_i32 = arith.constant 0 : i32
    %c0_i32_0 = arith.constant 0 : i32
    %c0_i32_1 = arith.constant 0 : i32
    return %c0_i32, %c0_i32_0 : i32, i32
  }
  func.func @transform_6(%arg0: i32) -> (i32, i32) {
    %c0_i32 = arith.constant 0 : i32
    %c0_i32_0 = arith.constant 0 : i32
    %c0_i32_1 = arith.constant 0 : i32
    return %c0_i32, %c0_i32_0 : i32, i32
  }
  func.func @transform_7(%arg0: i32) -> (i32, i32) {
    %c0_i32 = arith.constant 0 : i32
    %c0_i32_0 = arith.constant 0 : i32
    return %arg0, %c0_i32 : i32, i32
  }
}

</mosaic_0001>

<llo_original>
// kernel: tpu_custom_call.1
$region0: #{tpu_custom_call.1}
  #allocation0 [shape = 'u32[]', space=smem, size = 0x4, offset = 0x4, fixed_abs, tag = 'smem constant byte address 0x4 - core index']
  #allocation1 [shape = 'u32[72,128]{1,0:T(1,128)}', space=vmem, size = 0x9000, scoped, tag = 'internal scratch']
  %s0 = inlined_call_operand.hbm [shape: f32[16,784], index: 0, kind: input, shape index: {}]
  %s1 = inlined_call_operand.hbm [shape: bf16[784,512], index: 1, kind: input, shape index: {}]
  %s2 = inlined_call_operand.hbm [shape: f32[1,512], index: 2, kind: input, shape index: {}]
  %s3 = inlined_call_operand.hbm [shape: bf16[512,256], index: 3, kind: input, shape index: {}]
  %s4 = inlined_call_operand.vmem [shape: f32[1,256], index: 4, kind: input, shape index: {}]
  %s5 = inlined_call_operand.hbm [shape: bf16[256,128], index: 5, kind: input, shape index: {}]
  %s6 = inlined_call_operand.vmem [shape: f32[1,128], index: 6, kind: input, shape index: {}]
  %s7 = inlined_call_operand.hbm [shape: bf16[16,128], index: 7, kind: output, shape index: {}]
  %s8 = sld [smem:[#allocation0]]
  $region58: #{tpu_custom_call.1} parent=0
    _
  %s10 = ssub.s32 1, %s8
  %s11 = scalar_select 0, %s10, %s8
  $region1: #{tpu_custom_call.1} parent=0
    #allocation2 [shape = 'u8[57344]{0}', space=vmem, size = 0xe000, scoped, tag = 'input window, operand 0, single buffered']
    #allocation3 [shape = 's32[1]{0}', space=sflag, size = 0x4, scoped, tag = 'scoped memory for tpu_custom_call.1']
    #allocation4 [shape = 's32[1]{0}', space=sflag, size = 0x4, scoped, tag = 'scoped memory for tpu_custom_call.1']
    #allocation5 [shape = 'u8[802816]{0}', space=vmem, size = 0xc4000, scoped, tag = 'input window, operand 1, single buffered']
    #allocation6 [shape = 's32[1]{0}', space=sflag, size = 0x4, scoped, tag = 'scoped memory for tpu_custom_call.1']
    #allocation7 [shape = 'u8[2048]{0}', space=vmem, size = 0x800, scoped, tag = 'input window, operand 2, single buffered']
    #allocation8 [shape = 'u8[262144]{0}', space=vmem, size = 0x40000, scoped, tag = 'input window, operand 3, single buffered']
    #allocation9 [shape = 's32[1]{0}', space=sflag, size = 0x4, scoped, tag = 'scoped memory for tpu_custom_call.1']
    #allocation10 [shape = 'u8[65536]{0}', space=vmem, size = 0x10000, scoped, tag = 'input window, operand 5, single buffered']
    #allocation11 [shape = 'u8[4096]{0}', space=vmem, size = 0x1000, scoped, tag = 'output window, operand 0, single buffered']
    %12 = vsyncpa [#allocation3], 0
    %13 = vsyncpa [#allocation6], 0
    %14 = vsyncpa [#allocation9], 0
    %15 = vsyncpa [#allocation4], 0
    // Predicated region
    $region2: #{tpu_custom_call.1} parent=1 // pred_check
      _
    $region3: #{tpu_custom_call.1} parent=1 // pred_check_branch
      %17 = sbr.rel (0) target = $region5
    $region4: #{tpu_custom_call.1} parent=1 // pred_region
      %19 = vsyncadd [#allocation3], 0
      %s20 = sshll.u32 %s0, 4
      %s21 = int_to_ptr.hbm [resolvable:$true] %s20
      %s22 = sshll.u32 [#allocation2], 4
      %s23 = int_to_ptr.vmem [resolvable:$true] %s22
      %28 = dma.hbm_to_vmem [thread:$0]  %s21, 1792, %s23, [#allocation3], 896, 896, 56
    $region5: #{tpu_custom_call.1} parent=1 // pred_fallthru
      _
    // Predicated region
    $region6: #{tpu_custom_call.1} parent=1 // pred_check
      _
    $region7: #{tpu_custom_call.1} parent=1 // pred_check_branch
      %30 = sbr.rel (0) target = $region9
    $region8: #{tpu_custom_call.1} parent=1 // pred_region
      %32 = vsyncadd [#allocation6], 0
      %s33 = sshll.u32 %s1, 4
      %s34 = int_to_ptr.hbm [resolvable:$true] %s33
      %s35 = sshll.u32 [#allocation5], 4
      %s36 = int_to_ptr.vmem [resolvable:$true] %s35
      %41 = dma.hbm_to_vmem [thread:$0]  %s34, 25088, %s36, [#allocation6], 256, 256, 16
    $region9: #{tpu_custom_call.1} parent=1 // pred_fallthru
      _
    // Predicated region
    $region10: #{tpu_custom_call.1} parent=1 // pred_check
      _
    $region11: #{tpu_custom_call.1} parent=1 // pred_check_branch
      %43 = sbr.rel (0) target = $region13
    $region12: #{tpu_custom_call.1} parent=1 // pred_region
      %45 = vsyncadd [#allocation6], 0
      %s47 = sshll.u32 %s2, 4
      %s48 = int_to_ptr.hbm [resolvable:$true] %s47
      %s49 = sshll.u32 [#allocation7], 4
      %s50 = int_to_ptr.vmem [resolvable:$true] %s49
      %52 = dma.hbm_to_vmem [thread:$0]  %s48, 64, %s50, [#allocation6]
    $region13: #{tpu_custom_call.1} parent=1 // pred_fallthru
      _
    // Predicated region
    $region14: #{tpu_custom_call.1} parent=1 // pred_check
      _
    $region15: #{tpu_custom_call.1} parent=1 // pred_check_branch
      %54 = sbr.rel (0) target = $region17
    $region16: #{tpu_custom_call.1} parent=1 // pred_region
      %56 = vsyncadd [#allocation9], 0
      %s57 = sshll.u32 %s3, 4
      %s58 = int_to_ptr.hbm [resolvable:$true] %s57
      %s59 = sshll.u32 [#allocation8], 4
      %s60 = int_to_ptr.vmem [resolvable:$true] %s59
      %65 = dma.hbm_to_vmem [thread:$0]  %s58, 8192, %s60, [#allocation9], 128, 128, 8
    $region17: #{tpu_custom_call.1} parent=1 // pred_fallthru
      _
    // Predicated region
    $region18: #{tpu_custom_call.1} parent=1 // pred_check
      _
    $region19: #{tpu_custom_call.1} parent=1 // pred_check_branch
      %67 = sbr.rel (0) target = $region21
    $region20: #{tpu_custom_call.1} parent=1 // pred_region
      _
    $region21: #{tpu_custom_call.1} parent=1 // pred_fallthru
      _
    // Predicated region
    $region22: #{tpu_custom_call.1} parent=1 // pred_check
      _
    $region23: #{tpu_custom_call.1} parent=1 // pred_check_branch
      %69 = sbr.rel (0) target = $region25
    $region24: #{tpu_custom_call.1} parent=1 // pred_region
      %71 = vsyncadd [#allocation9], 0
      %s72 = sshll.u32 %s5, 4
      %s73 = int_to_ptr.hbm [resolvable:$true] %s72
      %s74 = sshll.u32 [#allocation10], 4
      %s75 = int_to_ptr.vmem [resolvable:$true] %s74
      %80 = dma.hbm_to_vmem [thread:$0]  %s73, 2048, %s75, [#allocation9], 64, 64, 4
    $region25: #{tpu_custom_call.1} parent=1 // pred_fallthru
      _
    // Predicated region
    $region26: #{tpu_custom_call.1} parent=1 // pred_check
      _
    $region27: #{tpu_custom_call.1} parent=1 // pred_check_branch
      %82 = sbr.rel (0) target = $region29
    $region28: #{tpu_custom_call.1} parent=1 // pred_region
      _
    $region29: #{tpu_custom_call.1} parent=1 // pred_fallthru
      _
    // Predicated region
    $region30: #{tpu_custom_call.1} parent=1 // pred_check
      _
    $region31: #{tpu_custom_call.1} parent=1 // pred_check_branch
      %84 = sbr.rel (0) target = $region33
    $region32: #{tpu_custom_call.1} parent=1 // pred_region
      %86 = dma.done [#allocation3], 1792
    $region33: #{tpu_custom_call.1} parent=1 // pred_fallthru
      _
    // Predicated region
    $region34: #{tpu_custom_call.1} parent=1 // pred_check
      _
    $region35: #{tpu_custom_call.1} parent=1 // pred_check_branch
      %88 = sbr.rel (0) target = $region37
    $region36: #{tpu_custom_call.1} parent=1 // pred_region
      %90 = dma.done [#allocation6], 25088
    $region37: #{tpu_custom_call.1} parent=1 // pred_fallthru
      _
    // Predicated region
    $region38: #{tpu_custom_call.1} parent=1 // pred_check
      _
    $region39: #{tpu_custom_call.1} parent=1 // pred_check_branch
      %92 = sbr.rel (0) target = $region41
    $region40: #{tpu_custom_call.1} parent=1 // pred_region
      %94 = dma.done [#allocation6], 64
    $region41: #{tpu_custom_call.1} parent=1 // pred_fallthru
      _
    // Predicated region
    $region42: #{tpu_custom_call.1} parent=1 // pred_check
      _
    $region43: #{tpu_custom_call.1} parent=1 // pred_check_branch
      %96 = sbr.rel (0) target = $region45
    $region44: #{tpu_custom_call.1} parent=1 // pred_region
      %98 = dma.done [#allocation9], 8192
    $region45: #{tpu_custom_call.1} parent=1 // pred_fallthru
      _
    // Predicated region
    $region46: #{tpu_custom_call.1} parent=1 // pred_check
      _
    $region47: #{tpu_custom_call.1} parent=1 // pred_check_branch
      %100 = sbr.rel (0) target = $region49
    $region48: #{tpu_custom_call.1} parent=1 // pred_region
      %102 = dma.done [#allocation9], 2048
    $region49: #{tpu_custom_call.1} parent=1 // pred_fallthru
      _
    %v104 = vld [vmem:[#allocation2] sm:$0xff]
    %v105 = vld [vmem:[#allocation2 + $0x8] sm:$0xff]
    %v106 = vld [vmem:[#allocation2 + $0x10] sm:$0xff]
    %v107 = vld [vmem:[#allocation2 + $0x18] sm:$0xff]
    %v108 = vld [vmem:[#allocation2 + $0x20] sm:$0xff]
    %v109 = vld [vmem:[#allocation2 + $0x28] sm:$0xff]
    %v110 = vld [vmem:[#allocation2 + $0x30] sm:$0xff]
    %v111 = vld [vmem:[#allocation2 + $0x38] sm:$0xff]
    %v112 = vld [vmem:[#allocation2 + $0x40] sm:$0xff]
    %v113 = vld [vmem:[#allocation2 + $0x48] sm:$0xff]
    %v114 = vld [vmem:[#allocation2 + $0x50] sm:$0xff]
    %v115 = vld [vmem:[#allocation2 + $0x58] sm:$0xff]
    %v116 = vld [vmem:[#allocation2 + $0x60] sm:$0xff]
    %v117 = vld [vmem:[#allocation2 + $0x68] sm:$0xff]
    %v118 = vpack.c.bf16 %v111, %v104
    %v119 = vpack.c.bf16 %v112, %v105
    %v120 = vpack.c.bf16 %v113, %v106
    %v121 = vpack.c.bf16 %v114, %v107
    %v122 = vpack.c.bf16 %v115, %v108
    %v123 = vpack.c.bf16 %v116, %v109
    %v124 = vpack.c.bf16 %v117, %v110
    %v125 = vld [vmem:[#allocation5] sm:$0xff]
    %v126 = vld [vmem:[#allocation5 + $0x8] sm:$0xff]
    %v127 = vld [vmem:[#allocation5 + $0x10] sm:$0xff]
    %v128 = vld [vmem:[#allocation5 + $0x18] sm:$0xff]
    %v129 = vld [vmem:[#allocation5 + $0x20] sm:$0xff]
    %v130 = vld [vmem:[#allocation5 + $0x28] sm:$0xff]
    %v131 = vld [vmem:[#allocation5 + $0x30] sm:$0xff]
    %v132 = vld [vmem:[#allocation5 + $0x38] sm:$0xff]
    %v133 = vld [vmem:[#allocation5 + $0x40] sm:$0xff]
    %v134 = vld [vmem:[#allocation5 + $0x48] sm:$0xff]
    %v135 = vld [vmem:[#allocation5 + $0x50] sm:$0xff]
    %v136 = vld [vmem:[#allocation5 + $0x58] sm:$0xff]
    %v137 = vld [vmem:[#allocation5 + $0x60] sm:$0xff]
    %v138 = vld [vmem:[#allocation5 + $0x68] sm:$0xff]
    %v139 = vld [vmem:[#allocation5 + $0x70] sm:$0xff]
    %v140 = vld [vmem:[#allocation5 + $0x78] sm:$0xff]
    %v141 = vld [vmem:[#allocation5 + $0x80] sm:$0xff]
    %v142 = vld [vmem:[#allocation5 + $0x88] sm:$0xff]
    %v143 = vld [vmem:[#allocation5 + $0x90] sm:$0xff]
    %v144 = vld [vmem:[#allocation5 + $0x98] sm:$0xff]
    %v145 = vld [vmem:[#allocation5 + $0xa0] sm:$0xff]
    %v146 = vld [vmem:[#allocation5 + $0xa8] sm:$0xff]
    %v147 = vld [vmem:[#allocation5 + $0xb0] sm:$0xff]
    %v148 = vld [vmem:[#allocation5 + $0xb8] sm:$0xff]
    %v149 = vld [vmem:[#allocation5 + $0xc0] sm:$0xff]
    %v150 = vld [vmem:[#allocation5 + $0xc8] sm:$0xff]
    %v151 = vld [vmem:[#allocation5 + $0xd0] sm:$0xff]
    %v152 = vld [vmem:[#allocation5 + $0xd8] sm:$0xff]
    %v153 = vld [vmem:[#allocation5 + $0xe0] sm:$0xff]
    %v154 = vld [vmem:[#allocation5 + $0xe8] sm:$0xff]
    %v155 = vld [vmem:[#allocation5 + $0xf0] sm:$0xff]
    %v156 = vld [vmem:[#allocation5 + $0xf8] sm:$0xff]
    %v157 = vld [vmem:[#allocation5 + $0x100] sm:$0xff]
    %v158 = vld [vmem:[#allocation5 + $0x108] sm:$0xff]
    %v159 = vld [vmem:[#allocation5 + $0x110] sm:$0xff]
    %v160 = vld [vmem:[#allocation5 + $0x118] sm:$0xff]
    %v161 = vld [vmem:[#allocation5 + $0x120] sm:$0xff]
    %v162 = vld [vmem:[#allocation5 + $0x128] sm:$0xff]
    %v163 = vld [vmem:[#allocation5 + $0x130] sm:$0xff]
    %v164 = vld [vmem:[#allocation5 + $0x138] sm:$0xff]
    %v165 = vld [vmem:[#allocation5 + $0x140] sm:$0xff]
    %v166 = vld [vmem:[#allocation5 + $0x148] sm:$0xff]
    %v167 = vld [vmem:[#allocation5 + $0x150] sm:$0xff]
    %v168 = vld [vmem:[#allocation5 + $0x158] sm:$0xff]
    %v169 = vld [vmem:[#allocation5 + $0x160] sm:$0xff]
    %v170 = vld [vmem:[#allocation5 + $0x168] sm:$0xff]
    %v171 = vld [vmem:[#allocation5 + $0x170] sm:$0xff]
    %v172 = vld [vmem:[#allocation5 + $0x178] sm:$0xff]
    %v173 = vld [vmem:[#allocation5 + $0x180] sm:$0xff]
    %v174 = vld [vmem:[#allocation5 + $0x188] sm:$0xff]
    %v175 = vld [vmem:[#allocation5 + $0x190] sm:$0xff]
    %v176 = vld [vmem:[#allocation5 + $0x198] sm:$0xff]
    %v177 = vld [vmem:[#allocation5 + $0x1a0] sm:$0xff]
    %v178 = vld [vmem:[#allocation5 + $0x1a8] sm:$0xff]
    %v179 = vld [vmem:[#allocation5 + $0x1b0] sm:$0xff]
    %v180 = vld [vmem:[#allocation5 + $0x1b8] sm:$0xff]
    %v181 = vld [vmem:[#allocation5 + $0x1c0] sm:$0xff]
    %v182 = vld [vmem:[#allocation5 + $0x1c8] sm:$0xff]
    %v183 = vld [vmem:[#allocation5 + $0x1d0] sm:$0xff]
    %v184 = vld [vmem:[#allocation5 + $0x1d8] sm:$0xff]
    %v185 = vld [vmem:[#allocation5 + $0x1e0] sm:$0xff]
    %v186 = vld [vmem:[#allocation5 + $0x1e8] sm:$0xff]
    %v187 = vld [vmem:[#allocation5 + $0x1f0] sm:$0xff]
    %v188 = vld [vmem:[#allocation5 + $0x1f8] sm:$0xff]
    %v189 = vld [vmem:[#allocation5 + $0x200] sm:$0xff]
    %v190 = vld [vmem:[#allocation5 + $0x208] sm:$0xff]
    %v191 = vld [vmem:[#allocation5 + $0x210] sm:$0xff]
    %v192 = vld [vmem:[#allocation5 + $0x218] sm:$0xff]
    %v193 = vld [vmem:[#allocation5 + $0x220] sm:$0xff]
    %v194 = vld [vmem:[#allocation5 + $0x228] sm:$0xff]
    %v195 = vld [vmem:[#allocation5 + $0x230] sm:$0xff]
    %v196 = vld [vmem:[#allocation5 + $0x238] sm:$0xff]
    %v197 = vld [vmem:[#allocation5 + $0x240] sm:$0xff]
    %v198 = vld [vmem:[#allocation5 + $0x248] sm:$0xff]
    %v199 = vld [vmem:[#allocation5 + $0x250] sm:$0xff]
    %v200 = vld [vmem:[#allocation5 + $0x258] sm:$0xff]
    %v201 = vld [vmem:[#allocation5 + $0x260] sm:$0xff]
    %v202 = vld [vmem:[#allocation5 + $0x268] sm:$0xff]
    %v203 = vld [vmem:[#allocation5 + $0x270] sm:$0xff]
    %v204 = vld [vmem:[#allocation5 + $0x278] sm:$0xff]
    %v205 = vld [vmem:[#allocation5 + $0x280] sm:$0xff]
    %v206 = vld [vmem:[#allocation5 + $0x288] sm:$0xff]
    %v207 = vld [vmem:[#allocation5 + $0x290] sm:$0xff]
    %v208 = vld [vmem:[#allocation5 + $0x298] sm:$0xff]
    %v209 = vld [vmem:[#allocation5 + $0x2a0] sm:$0xff]
    %v210 = vld [vmem:[#allocation5 + $0x2a8] sm:$0xff]
    %v211 = vld [vmem:[#allocation5 + $0x2b0] sm:$0xff]
    %v212 = vld [vmem:[#allocation5 + $0x2b8] sm:$0xff]
    %v213 = vld [vmem:[#allocation5 + $0x2c0] sm:$0xff]
    %v214 = vld [vmem:[#allocation5 + $0x2c8] sm:$0xff]
    %v215 = vld [vmem:[#allocation5 + $0x2d0] sm:$0xff]
    %v216 = vld [vmem:[#allocation5 + $0x2d8] sm:$0xff]
    %v217 = vld [vmem:[#allocation5 + $0x2e0] sm:$0xff]
    %v218 = vld [vmem:[#allocation5 + $0x2e8] sm:$0xff]
    %v219 = vld [vmem:[#allocation5 + $0x2f0] sm:$0xff]
    %v220 = vld [vmem:[#allocation5 + $0x2f8] sm:$0xff]
    %v221 = vld [vmem:[#allocation5 + $0x300] sm:$0xff]
    %v222 = vld [vmem:[#allocation5 + $0x308] sm:$0xff]
    %v223 = vld [vmem:[#allocation5 + $0x310] sm:$0xff]
    %v224 = vld [vmem:[#allocation5 + $0x318] sm:$0xff]
    %v225 = vld [vmem:[#allocation5 + $0x320] sm:$0xff]
    %v226 = vld [vmem:[#allocation5 + $0x328] sm:$0xff]
    %v227 = vld [vmem:[#allocation5 + $0x330] sm:$0xff]
    %v228 = vld [vmem:[#allocation5 + $0x338] sm:$0xff]
    %v229 = vld [vmem:[#allocation5 + $0x340] sm:$0xff]
    %v230 = vld [vmem:[#allocation5 + $0x348] sm:$0xff]
    %v231 = vld [vmem:[#allocation5 + $0x350] sm:$0xff]
    %v232 = vld [vmem:[#allocation5 + $0x358] sm:$0xff]
    %v233 = vld [vmem:[#allocation5 + $0x360] sm:$0xff]
    %v234 = vld [vmem:[#allocation5 + $0x368] sm:$0xff]
    %v235 = vld [vmem:[#allocation5 + $0x370] sm:$0xff]
    %v236 = vld [vmem:[#allocation5 + $0x378] sm:$0xff]
    %v237 = vld [vmem:[#allocation5 + $0x380] sm:$0xff]
    %v238 = vld [vmem:[#allocation5 + $0x388] sm:$0xff]
    %v239 = vld [vmem:[#allocation5 + $0x390] sm:$0xff]
    %v240 = vld [vmem:[#allocation5 + $0x398] sm:$0xff]
    %v241 = vld [vmem:[#allocation5 + $0x3a0] sm:$0xff]
    %v242 = vld [vmem:[#allocation5 + $0x3a8] sm:$0xff]
    %v243 = vld [vmem:[#allocation5 + $0x3b0] sm:$0xff]
    %v244 = vld [vmem:[#allocation5 + $0x3b8] sm:$0xff]
    %v245 = vld [vmem:[#allocation5 + $0x3c0] sm:$0xff]
    %v246 = vld [vmem:[#allocation5 + $0x3c8] sm:$0xff]
    %v247 = vld [vmem:[#allocation5 + $0x3d0] sm:$0xff]
    %v248 = vld [vmem:[#allocation5 + $0x3d8] sm:$0xff]
    %v249 = vld [vmem:[#allocation5 + $0x3e0] sm:$0xff]
    %v250 = vld [vmem:[#allocation5 + $0x3e8] sm:$0xff]
    %v251 = vld [vmem:[#allocation5 + $0x3f0] sm:$0xff]
    %v252 = vld [vmem:[#allocation5 + $0x3f8] sm:$0xff]
    %v253 = vld [vmem:[#allocation5 + $0x400] sm:$0xff]
    %v254 = vld [vmem:[#allocation5 + $0x408] sm:$0xff]
    %v255 = vld [vmem:[#allocation5 + $0x410] sm:$0xff]
    %v256 = vld [vmem:[#allocation5 + $0x418] sm:$0xff]
    %v257 = vld [vmem:[#allocation5 + $0x420] sm:$0xff]
    %v258 = vld [vmem:[#allocation5 + $0x428] sm:$0xff]
    %v259 = vld [vmem:[#allocation5 + $0x430] sm:$0xff]
    %v260 = vld [vmem:[#allocation5 + $0x438] sm:$0xff]
    %v261 = vld [vmem:[#allocation5 + $0x440] sm:$0xff]
    %v262 = vld [vmem:[#allocation5 + $0x448] sm:$0xff]
    %v263 = vld [vmem:[#allocation5 + $0x450] sm:$0xff]
    %v264 = vld [vmem:[#allocation5 + $0x458] sm:$0xff]
    %v265 = vld [vmem:[#allocation5 + $0x460] sm:$0xff]
    %v266 = vld [vmem:[#allocation5 + $0x468] sm:$0xff]
    %v267 = vld [vmem:[#allocation5 + $0x470] sm:$0xff]
    %v268 = vld [vmem:[#allocation5 + $0x478] sm:$0xff]
    %v269 = vld [vmem:[#allocation5 + $0x480] sm:$0xff]
    %v270 = vld [vmem:[#allocation5 + $0x488] sm:$0xff]
    %v271 = vld [vmem:[#allocation5 + $0x490] sm:$0xff]
    %v272 = vld [vmem:[#allocation5 + $0x498] sm:$0xff]
    %v273 = vld [vmem:[#allocation5 + $0x4a0] sm:$0xff]
    %v274 = vld [vmem:[#allocation5 + $0x4a8] sm:$0xff]
    %v275 = vld [vmem:[#allocation5 + $0x4b0] sm:$0xff]
    %v276 = vld [vmem:[#allocation5 + $0x4b8] sm:$0xff]
    %v277 = vld [vmem:[#allocation5 + $0x4c0] sm:$0xff]
    %v278 = vld [vmem:[#allocation5 + $0x4c8] sm:$0xff]
    %v279 = vld [vmem:[#allocation5 + $0x4d0] sm:$0xff]
    %v280 = vld [vmem:[#allocation5 + $0x4d8] sm:$0xff]
    %v281 = vld [vmem:[#allocation5 + $0x4e0] sm:$0xff]
    %v282 = vld [vmem:[#allocation5 + $0x4e8] sm:$0xff]
    %v283 = vld [vmem:[#allocation5 + $0x4f0] sm:$0xff]
    %v284 = vld [vmem:[#allocation5 + $0x4f8] sm:$0xff]
    %v285 = vld [vmem:[#allocation5 + $0x500] sm:$0xff]
    %v286 = vld [vmem:[#allocation5 + $0x508] sm:$0xff]
    %v287 = vld [vmem:[#allocation5 + $0x510] sm:$0xff]
    %v288 = vld [vmem:[#allocation5 + $0x518] sm:$0xff]
    %v289 = vld [vmem:[#allocation5 + $0x520] sm:$0xff]
    %v290 = vld [vmem:[#allocation5 + $0x528] sm:$0xff]
    %v291 = vld [vmem:[#allocation5 + $0x530] sm:$0xff]
    %v292 = vld [vmem:[#allocation5 + $0x538] sm:$0xff]
    %v293 = vld [vmem:[#allocation5 + $0x540] sm:$0xff]
    %v294 = vld [vmem:[#allocation5 + $0x548] sm:$0xff]
    %v295 = vld [vmem:[#allocation5 + $0x550] sm:$0xff]
    %v296 = vld [vmem:[#allocation5 + $0x558] sm:$0xff]
    %v297 = vld [vmem:[#allocation5 + $0x560] sm:$0xff]
    %v298 = vld [vmem:[#allocation5 + $0x568] sm:$0xff]
    %v299 = vld [vmem:[#allocation5 + $0x570] sm:$0xff]
    %v300 = vld [vmem:[#allocation5 + $0x578] sm:$0xff]
    %v301 = vld [vmem:[#allocation5 + $0x580] sm:$0xff]
    %v302 = vld [vmem:[#allocation5 + $0x588] sm:$0xff]
    %v303 = vld [vmem:[#allocation5 + $0x590] sm:$0xff]
    %v304 = vld [vmem:[#allocation5 + $0x598] sm:$0xff]
    %v305 = vld [vmem:[#allocation5 + $0x5a0] sm:$0xff]
    %v306 = vld [vmem:[#allocation5 + $0x5a8] sm:$0xff]
    %v307 = vld [vmem:[#allocation5 + $0x5b0] sm:$0xff]
    %v308 = vld [vmem:[#allocation5 + $0x5b8] sm:$0xff]
    %v309 = vld [vmem:[#allocation5 + $0x5c0] sm:$0xff]
    %v310 = vld [vmem:[#allocation5 + $0x5c8] sm:$0xff]
    %v311 = vld [vmem:[#allocation5 + $0x5d0] sm:$0xff]
    %v312 = vld [vmem:[#allocation5 + $0x5d8] sm:$0xff]
    %v313 = vld [vmem:[#allocation5 + $0x5e0] sm:$0xff]
    %v314 = vld [vmem:[#allocation5 + $0x5e8] sm:$0xff]
    %v315 = vld [vmem:[#allocation5 + $0x5f0] sm:$0xff]
    %v316 = vld [vmem:[#allocation5 + $0x5f8] sm:$0xff]
    %v317 = vld [vmem:[#allocation5 + $0x600] sm:$0xff]
    %v318 = vld [vmem:[#allocation5 + $0x608] sm:$0xff]
    %v319 = vld [vmem:[#allocation5 + $0x610] sm:$0xff]
    %v320 = vld [vmem:[#allocation5 + $0x618] sm:$0xff]
    %v321 = vld [vmem:[#allocation7] sm:$0xf]
    %v323 = vperm.slane %v321, 0
    %v324 = vperm.slane %v321, 1
    %v325 = vperm.slane %v321, 2
    %v326 = vperm.slane %v321, 3
    %v527 = vunpack.c.l.b16 %v125
    %v528 = vunpack.c.h.b16 %v125
    %v529 = vunpack.c.l.b16 %v126
    %v530 = vunpack.c.h.b16 %v126
    %v531 = vunpack.c.l.b16 %v127
    %v532 = vunpack.c.h.b16 %v127
    %v533 = vunpack.c.l.b16 %v128
    %v534 = vunpack.c.h.b16 %v128
    %v535 = vunpack.c.l.b16 %v129
    %v536 = vunpack.c.h.b16 %v129
    %v537 = vunpack.c.l.b16 %v130
    %v538 = vunpack.c.h.b16 %v130
    %v539 = vunpack.c.l.b16 %v131
    %v540 = vunpack.c.h.b16 %v131
    %v541 = vunpack.c.l.b16 %v132
    %v542 = vunpack.c.h.b16 %v132
    %v543 = vunpack.c.l.b16 %v133
    %v544 = vunpack.c.h.b16 %v133
    %v545 = vunpack.c.l.b16 %v134
    %v546 = vunpack.c.h.b16 %v134
    %v547 = vunpack.c.l.b16 %v135
    %v548 = vunpack.c.h.b16 %v135
    %v549 = vunpack.c.l.b16 %v136
    %v550 = vunpack.c.h.b16 %v136
    %v551 = vunpack.c.l.b16 %v137
    %v552 = vunpack.c.h.b16 %v137
    %v553 = vunpack.c.l.b16 %v138
    %v554 = vunpack.c.h.b16 %v138
    %v555 = vunpack.c.l.b16 %v139
    %v556 = vunpack.c.h.b16 %v139
    %v557 = vunpack.c.l.b16 %v140
    %v558 = vunpack.c.h.b16 %v140
    %v559 = vunpack.c.l.b16 %v141
    %v560 = vunpack.c.h.b16 %v141
    %v561 = vunpack.c.l.b16 %v142
    %v562 = vunpack.c.h.b16 %v142
    %v563 = vunpack.c.l.b16 %v143
    %v564 = vunpack.c.h.b16 %v143
    %v565 = vunpack.c.l.b16 %v144
    %v566 = vunpack.c.h.b16 %v144
    %v567 = vunpack.c.l.b16 %v145
    %v568 = vunpack.c.h.b16 %v145
    %v569 = vunpack.c.l.b16 %v146
    %v570 = vunpack.c.h.b16 %v146
    %v571 = vunpack.c.l.b16 %v147
    %v572 = vunpack.c.h.b16 %v147
    %v573 = vunpack.c.l.b16 %v148
    %v574 = vunpack.c.h.b16 %v148
    %v575 = vunpack.c.l.b16 %v149
    %v576 = vunpack.c.h.b16 %v149
    %v577 = vunpack.c.l.b16 %v150
    %v578 = vunpack.c.h.b16 %v150
    %v579 = vunpack.c.l.b16 %v151
    %v580 = vunpack.c.h.b16 %v151
    %v581 = vunpack.c.l.b16 %v152
    %v582 = vunpack.c.h.b16 %v152
    %v583 = vunpack.c.l.b16 %v153
    %v584 = vunpack.c.h.b16 %v153
    %v585 = vunpack.c.l.b16 %v154
    %v586 = vunpack.c.h.b16 %v154
    %v587 = vunpack.c.l.b16 %v155
    %v588 = vunpack.c.h.b16 %v155
    %v589 = vunpack.c.l.b16 %v156
    %v590 = vunpack.c.h.b16 %v156
    %v591 = vunpack.c.l.b16 %v157
    %v592 = vunpack.c.h.b16 %v157
    %v593 = vunpack.c.l.b16 %v158
    %v594 = vunpack.c.h.b16 %v158
    %v595 = vunpack.c.l.b16 %v159
    %v596 = vunpack.c.h.b16 %v159
    %v597 = vunpack.c.l.b16 %v160
    %v598 = vunpack.c.h.b16 %v160
    %v599 = vunpack.c.l.b16 %v161
    %v600 = vunpack.c.h.b16 %v161
    %v601 = vunpack.c.l.b16 %v162
    %v602 = vunpack.c.h.b16 %v162
    %v603 = vunpack.c.l.b16 %v163
    %v604 = vunpack.c.h.b16 %v163
    %v605 = vunpack.c.l.b16 %v164
    %v606 = vunpack.c.h.b16 %v164
    %v607 = vunpack.c.l.b16 %v165
    %v608 = vunpack.c.h.b16 %v165
    %v609 = vunpack.c.l.b16 %v166
    %v610 = vunpack.c.h.b16 %v166
    %v611 = vunpack.c.l.b16 %v167
    %v612 = vunpack.c.h.b16 %v167
    %v613 = vunpack.c.l.b16 %v168
    %v614 = vunpack.c.h.b16 %v168
    %v615 = vunpack.c.l.b16 %v169
    %v616 = vunpack.c.h.b16 %v169
    %v617 = vunpack.c.l.b16 %v170
    %v618 = vunpack.c.h.b16 %v170
    %v619 = vunpack.c.l.b16 %v171
    %v620 = vunpack.c.h.b16 %v171
    %v621 = vunpack.c.l.b16 %v172
    %v622 = vunpack.c.h.b16 %v172
    %v623 = vunpack.c.l.b16 %v173
    %v624 = vunpack.c.h.b16 %v173
    %v625 = vunpack.c.l.b16 %v174
    %v626 = vunpack.c.h.b16 %v174
    %v627 = vunpack.c.l.b16 %v175
    %v628 = vunpack.c.h.b16 %v175
    %v629 = vunpack.c.l.b16 %v176
    %v630 = vunpack.c.h.b16 %v176
    %v631 = vunpack.c.l.b16 %v177
    %v632 = vunpack.c.h.b16 %v177
    %v633 = vunpack.c.l.b16 %v178
    %v634 = vunpack.c.h.b16 %v178
    %v635 = vunpack.c.l.b16 %v179
    %v636 = vunpack.c.h.b16 %v179
    %v637 = vunpack.c.l.b16 %v180
    %v638 = vunpack.c.h.b16 %v180
    %v639 = vunpack.c.l.b16 %v181
    %v640 = vunpack.c.h.b16 %v181
    %v641 = vunpack.c.l.b16 %v182
    %v642 = vunpack.c.h.b16 %v182
    %v643 = vunpack.c.l.b16 %v183
    %v644 = vunpack.c.h.b16 %v183
    %v645 = vunpack.c.l.b16 %v184
    %v646 = vunpack.c.h.b16 %v184
    %v647 = vunpack.c.l.b16 %v185
    %v648 = vunpack.c.h.b16 %v185
    %v649 = vunpack.c.l.b16 %v186
    %v650 = vunpack.c.h.b16 %v186
    %v651 = vunpack.c.l.b16 %v187
    %v652 = vunpack.c.h.b16 %v187
    %v653 = vunpack.c.l.b16 %v188
    %v654 = vunpack.c.h.b16 %v188
    %v655 = vunpack.c.l.b16 %v189
    %v656 = vunpack.c.h.b16 %v189
    %v657 = vunpack.c.l.b16 %v190
    %v658 = vunpack.c.h.b16 %v190
    %v659 = vunpack.c.l.b16 %v191
    %v660 = vunpack.c.h.b16 %v191
    %v661 = vunpack.c.l.b16 %v192
    %v662 = vunpack.c.h.b16 %v192
    %v663 = vunpack.c.l.b16 %v193
    %v664 = vunpack.c.h.b16 %v193
    %v665 = vunpack.c.l.b16 %v194
    %v666 = vunpack.c.h.b16 %v194
    %v667 = vunpack.c.l.b16 %v195
    %v668 = vunpack.c.h.b16 %v195
    %v669 = vunpack.c.l.b16 %v196
    %v670 = vunpack.c.h.b16 %v196
    %v671 = vunpack.c.l.b16 %v197
    %v672 = vunpack.c.h.b16 %v197
    %v673 = vunpack.c.l.b16 %v198
    %v674 = vunpack.c.h.b16 %v198
    %v675 = vunpack.c.l.b16 %v199
    %v676 = vunpack.c.h.b16 %v199
    %v677 = vunpack.c.l.b16 %v200
    %v678 = vunpack.c.h.b16 %v200
    %v679 = vunpack.c.l.b16 %v201
    %v680 = vunpack.c.h.b16 %v201
    %v681 = vunpack.c.l.b16 %v202
    %v682 = vunpack.c.h.b16 %v202
    %v683 = vunpack.c.l.b16 %v203
    %v684 = vunpack.c.h.b16 %v203
    %v685 = vunpack.c.l.b16 %v204
    %v686 = vunpack.c.h.b16 %v204
    %v687 = vunpack.c.l.b16 %v205
    %v688 = vunpack.c.h.b16 %v205
    %v689 = vunpack.c.l.b16 %v206
    %v690 = vunpack.c.h.b16 %v206
    %v691 = vunpack.c.l.b16 %v207
    %v692 = vunpack.c.h.b16 %v207
    %v693 = vunpack.c.l.b16 %v208
    %v694 = vunpack.c.h.b16 %v208
    %v695 = vunpack.c.l.b16 %v209
    %v696 = vunpack.c.h.b16 %v209
    %v697 = vunpack.c.l.b16 %v210
    %v698 = vunpack.c.h.b16 %v210
    %v699 = vunpack.c.l.b16 %v211
    %v700 = vunpack.c.h.b16 %v211
    %v701 = vunpack.c.l.b16 %v212
    %v702 = vunpack.c.h.b16 %v212
    %v703 = vunpack.c.l.b16 %v213
    %v704 = vunpack.c.h.b16 %v213
    %v705 = vunpack.c.l.b16 %v214
    %v706 = vunpack.c.h.b16 %v214
    %v707 = vunpack.c.l.b16 %v215
    %v708 = vunpack.c.h.b16 %v215
    %v709 = vunpack.c.l.b16 %v216
    %v710 = vunpack.c.h.b16 %v216
    %v711 = vunpack.c.l.b16 %v217
    %v712 = vunpack.c.h.b16 %v217
    %v713 = vunpack.c.l.b16 %v218
    %v714 = vunpack.c.h.b16 %v218
    %v715 = vunpack.c.l.b16 %v219
    %v716 = vunpack.c.h.b16 %v219
    %v717 = vunpack.c.l.b16 %v220
    %v718 = vunpack.c.h.b16 %v220
    %v719 = vunpack.c.l.b16 %v221
    %v720 = vunpack.c.h.b16 %v221
    %v721 = vunpack.c.l.b16 %v222
    %v722 = vunpack.c.h.b16 %v222
    %v723 = vunpack.c.l.b16 %v223
    %v724 = vunpack.c.h.b16 %v223
    %v725 = vunpack.c.l.b16 %v224
    %v726 = vunpack.c.h.b16 %v224
    %v727 = vunpack.c.l.b16 %v225
    %v728 = vunpack.c.h.b16 %v225
    %v729 = vunpack.c.l.b16 %v226
    %v730 = vunpack.c.h.b16 %v226
    %v731 = vunpack.c.l.b16 %v227
    %v732 = vunpack.c.h.b16 %v227
    %v733 = vunpack.c.l.b16 %v228
    %v734 = vunpack.c.h.b16 %v228
    %v735 = vunpack.c.l.b16 %v229
    %v736 = vunpack.c.h.b16 %v229
    %v737 = vunpack.c.l.b16 %v230
    %v738 = vunpack.c.h.b16 %v230
    %v739 = vunpack.c.l.b16 %v231
    %v740 = vunpack.c.h.b16 %v231
    %v741 = vunpack.c.l.b16 %v232
    %v742 = vunpack.c.h.b16 %v232
    %v743 = vunpack.c.l.b16 %v233
    %v744 = vunpack.c.h.b16 %v233
    %v745 = vunpack.c.l.b16 %v234
    %v746 = vunpack.c.h.b16 %v234
    %v747 = vunpack.c.l.b16 %v235
    %v748 = vunpack.c.h.b16 %v235
    %v749 = vunpack.c.l.b16 %v236
    %v750 = vunpack.c.h.b16 %v236
    %v751 = vunpack.c.l.b16 %v237
    %v752 = vunpack.c.h.b16 %v237
    %v753 = vunpack.c.l.b16 %v238
    %v754 = vunpack.c.h.b16 %v238
    %v755 = vunpack.c.l.b16 %v239
    %v756 = vunpack.c.h.b16 %v239
    %v757 = vunpack.c.l.b16 %v240
    %v758 = vunpack.c.h.b16 %v240
    %v759 = vunpack.c.l.b16 %v241
    %v760 = vunpack.c.h.b16 %v241
    %v761 = vunpack.c.l.b16 %v242
    %v762 = vunpack.c.h.b16 %v242
    %v763 = vunpack.c.l.b16 %v243
    %v764 = vunpack.c.h.b16 %v243
    %v765 = vunpack.c.l.b16 %v244
    %v766 = vunpack.c.h.b16 %v244
    %v767 = vunpack.c.l.b16 %v245
    %v768 = vunpack.c.h.b16 %v245
    %v769 = vunpack.c.l.b16 %v246
    %v770 = vunpack.c.h.b16 %v246
    %v771 = vunpack.c.l.b16 %v247
    %v772 = vunpack.c.h.b16 %v247
    %v773 = vunpack.c.l.b16 %v248
    %v774 = vunpack.c.h.b16 %v248
    %v775 = vunpack.c.l.b16 %v249
    %v776 = vunpack.c.h.b16 %v249
    %v777 = vunpack.c.l.b16 %v250
    %v778 = vunpack.c.h.b16 %v250
    %v779 = vunpack.c.l.b16 %v251
    %v780 = vunpack.c.h.b16 %v251
    %v781 = vunpack.c.l.b16 %v252
    %v782 = vunpack.c.h.b16 %v252
    %v783 = vunpack.c.l.b16 %v253
    %v784 = vunpack.c.h.b16 %v253
    %v785 = vunpack.c.l.b16 %v254
    %v786 = vunpack.c.h.b16 %v254
    %v787 = vunpack.c.l.b16 %v255
    %v788 = vunpack.c.h.b16 %v255
    %v789 = vunpack.c.l.b16 %v256
    %v790 = vunpack.c.h.b16 %v256
    %v791 = vunpack.c.l.b16 %v257
    %v792 = vunpack.c.h.b16 %v257
    %v793 = vunpack.c.l.b16 %v258
    %v794 = vunpack.c.h.b16 %v258
    %v795 = vunpack.c.l.b16 %v259
    %v796 = vunpack.c.h.b16 %v259
    %v797 = vunpack.c.l.b16 %v260
    %v798 = vunpack.c.h.b16 %v260
    %v799 = vunpack.c.l.b16 %v261
    %v800 = vunpack.c.h.b16 %v261
    %v801 = vunpack.c.l.b16 %v262
    %v802 = vunpack.c.h.b16 %v262
    %v803 = vunpack.c.l.b16 %v263
    %v804 = vunpack.c.h.b16 %v263
    %v805 = vunpack.c.l.b16 %v264
    %v806 = vunpack.c.h.b16 %v264
    %v807 = vunpack.c.l.b16 %v265
    %v808 = vunpack.c.h.b16 %v265
    %v809 = vunpack.c.l.b16 %v266
    %v810 = vunpack.c.h.b16 %v266
    %v811 = vunpack.c.l.b16 %v267
    %v812 = vunpack.c.h.b16 %v267
    %v813 = vunpack.c.l.b16 %v268
    %v814 = vunpack.c.h.b16 %v268
    %v815 = vunpack.c.l.b16 %v269
    %v816 = vunpack.c.h.b16 %v269
    %v817 = vunpack.c.l.b16 %v270
    %v818 = vunpack.c.h.b16 %v270
    %v819 = vunpack.c.l.b16 %v271
    %v820 = vunpack.c.h.b16 %v271
    %v821 = vunpack.c.l.b16 %v272
    %v822 = vunpack.c.h.b16 %v272
    %v823 = vunpack.c.l.b16 %v273
    %v824 = vunpack.c.h.b16 %v273
    %v825 = vunpack.c.l.b16 %v274
    %v826 = vunpack.c.h.b16 %v274
    %v827 = vunpack.c.l.b16 %v275
    %v828 = vunpack.c.h.b16 %v275
    %v829 = vunpack.c.l.b16 %v276
    %v830 = vunpack.c.h.b16 %v276
    %v831 = vunpack.c.l.b16 %v277
    %v832 = vunpack.c.h.b16 %v277
    %v833 = vunpack.c.l.b16 %v278
    %v834 = vunpack.c.h.b16 %v278
    %v835 = vunpack.c.l.b16 %v279
    %v836 = vunpack.c.h.b16 %v279
    %v837 = vunpack.c.l.b16 %v280
    %v838 = vunpack.c.h.b16 %v280
    %v839 = vunpack.c.l.b16 %v281
    %v840 = vunpack.c.h.b16 %v281
    %v841 = vunpack.c.l.b16 %v282
    %v842 = vunpack.c.h.b16 %v282
    %v843 = vunpack.c.l.b16 %v283
    %v844 = vunpack.c.h.b16 %v283
    %v845 = vunpack.c.l.b16 %v284
    %v846 = vunpack.c.h.b16 %v284
    %v847 = vunpack.c.l.b16 %v285
    %v848 = vunpack.c.h.b16 %v285
    %v849 = vunpack.c.l.b16 %v286
    %v850 = vunpack.c.h.b16 %v286
    %v851 = vunpack.c.l.b16 %v287
    %v852 = vunpack.c.h.b16 %v287
    %v853 = vunpack.c.l.b16 %v288
    %v854 = vunpack.c.h.b16 %v288
    %v855 = vunpack.c.l.b16 %v289
    %v856 = vunpack.c.h.b16 %v289
    %v857 = vunpack.c.l.b16 %v290
    %v858 = vunpack.c.h.b16 %v290
    %v859 = vunpack.c.l.b16 %v291
    %v860 = vunpack.c.h.b16 %v291
    %v861 = vunpack.c.l.b16 %v292
    %v862 = vunpack.c.h.b16 %v292
    %v863 = vunpack.c.l.b16 %v293
    %v864 = vunpack.c.h.b16 %v293
    %v865 = vunpack.c.l.b16 %v294
    %v866 = vunpack.c.h.b16 %v294
    %v867 = vunpack.c.l.b16 %v295
    %v868 = vunpack.c.h.b16 %v295
    %v869 = vunpack.c.l.b16 %v296
    %v870 = vunpack.c.h.b16 %v296
    %v871 = vunpack.c.l.b16 %v297
    %v872 = vunpack.c.h.b16 %v297
    %v873 = vunpack.c.l.b16 %v298
    %v874 = vunpack.c.h.b16 %v298
    %v875 = vunpack.c.l.b16 %v299
    %v876 = vunpack.c.h.b16 %v299
    %v877 = vunpack.c.l.b16 %v300
    %v878 = vunpack.c.h.b16 %v300
    %v879 = vunpack.c.l.b16 %v301
    %v880 = vunpack.c.h.b16 %v301
    %v881 = vunpack.c.l.b16 %v302
    %v882 = vunpack.c.h.b16 %v302
    %v883 = vunpack.c.l.b16 %v303
    %v884 = vunpack.c.h.b16 %v303
    %v885 = vunpack.c.l.b16 %v304
    %v886 = vunpack.c.h.b16 %v304
    %v887 = vunpack.c.l.b16 %v305
    %v888 = vunpack.c.h.b16 %v305
    %v889 = vunpack.c.l.b16 %v306
    %v890 = vunpack.c.h.b16 %v306
    %v891 = vunpack.c.l.b16 %v307
    %v892 = vunpack.c.h.b16 %v307
    %v893 = vunpack.c.l.b16 %v308
    %v894 = vunpack.c.h.b16 %v308
    %v895 = vunpack.c.l.b16 %v309
    %v896 = vunpack.c.h.b16 %v309
    %v897 = vunpack.c.l.b16 %v310
    %v898 = vunpack.c.h.b16 %v310
    %v899 = vunpack.c.l.b16 %v311
    %v900 = vunpack.c.h.b16 %v311
    %v901 = vunpack.c.l.b16 %v312
    %v902 = vunpack.c.h.b16 %v312
    %v903 = vunpack.c.l.b16 %v313
    %v904 = vunpack.c.h.b16 %v313
    %v905 = vunpack.c.l.b16 %v314
    %v906 = vunpack.c.h.b16 %v314
    %v907 = vunpack.c.l.b16 %v315
    %v908 = vunpack.c.h.b16 %v315
    %v909 = vunpack.c.l.b16 %v316
    %v910 = vunpack.c.h.b16 %v316
    %v911 = vunpack.c.l.b16 %v317
    %v912 = vunpack.c.h.b16 %v317
    %v913 = vunpack.c.l.b16 %v318
    %v914 = vunpack.c.h.b16 %v318
    %v915 = vunpack.c.l.b16 %v319
    %v916 = vunpack.c.h.b16 %v319
    %v917 = vunpack.c.l.b16 %v320
    %v918 = vunpack.c.h.b16 %v320
    %v919 = vpack.c.b16 %v531, %v527
    %v920 = vpack.c.b16 %v532, %v528
    %v921 = vpack.c.b16 %v533, %v529
    %v922 = vpack.c.b16 %v534, %v530
    %v923 = vpack.c.b16 %v539, %v535
    %v924 = vpack.c.b16 %v540, %v536
    %v925 = vpack.c.b16 %v541, %v537
    %v926 = vpack.c.b16 %v542, %v538
    %v927 = vpack.c.b16 %v547, %v543
    %v928 = vpack.c.b16 %v548, %v544
    %v929 = vpack.c.b16 %v549, %v545
    %v930 = vpack.c.b16 %v550, %v546
    %v931 = vpack.c.b16 %v555, %v551
    %v932 = vpack.c.b16 %v556, %v552
    %v933 = vpack.c.b16 %v557, %v553
    %v934 = vpack.c.b16 %v558, %v554
    %v935 = vpack.c.b16 %v563, %v559
    %v936 = vpack.c.b16 %v564, %v560
    %v937 = vpack.c.b16 %v565, %v561
    %v938 = vpack.c.b16 %v566, %v562
    %v939 = vpack.c.b16 %v571, %v567
    %v940 = vpack.c.b16 %v572, %v568
    %v941 = vpack.c.b16 %v573, %v569
    %v942 = vpack.c.b16 %v574, %v570
    %v943 = vpack.c.b16 %v579, %v575
    %v944 = vpack.c.b16 %v580, %v576
    %v945 = vpack.c.b16 %v581, %v577
    %v946 = vpack.c.b16 %v582, %v578
    %v947 = vpack.c.b16 %v587, %v583
    %v948 = vpack.c.b16 %v588, %v584
    %v949 = vpack.c.b16 %v589, %v585
    %v950 = vpack.c.b16 %v590, %v586
    %v951 = vpack.c.b16 %v595, %v591
    %v952 = vpack.c.b16 %v596, %v592
    %v953 = vpack.c.b16 %v597, %v593
    %v954 = vpack.c.b16 %v598, %v594
    %v955 = vpack.c.b16 %v603, %v599
    %v956 = vpack.c.b16 %v604, %v600
    %v957 = vpack.c.b16 %v605, %v601
    %v958 = vpack.c.b16 %v606, %v602
    %v959 = vpack.c.b16 %v611, %v607
    %v960 = vpack.c.b16 %v612, %v608
    %v961 = vpack.c.b16 %v613, %v609
    %v962 = vpack.c.b16 %v614, %v610
    %v963 = vpack.c.b16 %v619, %v615
    %v964 = vpack.c.b16 %v620, %v616
    %v965 = vpack.c.b16 %v621, %v617
    %v966 = vpack.c.b16 %v622, %v618
    %v967 = vpack.c.b16 %v627, %v623
    %v968 = vpack.c.b16 %v628, %v624
    %v969 = vpack.c.b16 %v629, %v625
    %v970 = vpack.c.b16 %v630, %v626
    %v971 = vpack.c.b16 %v635, %v631
    %v972 = vpack.c.b16 %v636, %v632
    %v973 = vpack.c.b16 %v637, %v633
    %v974 = vpack.c.b16 %v638, %v634
    %v975 = vpack.c.b16 %v643, %v639
    %v976 = vpack.c.b16 %v644, %v640
    %v977 = vpack.c.b16 %v645, %v641
    %v978 = vpack.c.b16 %v646, %v642
    %v979 = vpack.c.b16 %v651, %v647
    %v980 = vpack.c.b16 %v652, %v648
    %v981 = vpack.c.b16 %v653, %v649
    %v982 = vpack.c.b16 %v654, %v650
    %v983 = vpack.c.b16 %v659, %v655
    %v984 = vpack.c.b16 %v660, %v656
    %v985 = vpack.c.b16 %v661, %v657
    %v986 = vpack.c.b16 %v662, %v658
    %v987 = vpack.c.b16 %v667, %v663
    %v988 = vpack.c.b16 %v668, %v664
    %v989 = vpack.c.b16 %v669, %v665
    %v990 = vpack.c.b16 %v670, %v666
    %v991 = vpack.c.b16 %v675, %v671
    %v992 = vpack.c.b16 %v676, %v672
    %v993 = vpack.c.b16 %v677, %v673
    %v994 = vpack.c.b16 %v678, %v674
    %v995 = vpack.c.b16 %v683, %v679
    %v996 = vpack.c.b16 %v684, %v680
    %v997 = vpack.c.b16 %v685, %v681
    %v998 = vpack.c.b16 %v686, %v682
    %v999 = vpack.c.b16 %v691, %v687
    %v1000 = vpack.c.b16 %v692, %v688
    %v1001 = vpack.c.b16 %v693, %v689
    %v1002 = vpack.c.b16 %v694, %v690
    %v1003 = vpack.c.b16 %v699, %v695
    %v1004 = vpack.c.b16 %v700, %v696
    %v1005 = vpack.c.b16 %v701, %v697
    %v1006 = vpack.c.b16 %v702, %v698
    %v1007 = vpack.c.b16 %v707, %v703
    %v1008 = vpack.c.b16 %v708, %v704
    %v1009 = vpack.c.b16 %v709, %v705
    %v1010 = vpack.c.b16 %v710, %v706
    %v1011 = vpack.c.b16 %v715, %v711
    %v1012 = vpack.c.b16 %v716, %v712
    %v1013 = vpack.c.b16 %v717, %v713
    %v1014 = vpack.c.b16 %v718, %v714
    %v1015 = vpack.c.b16 %v723, %v719
    %v1016 = vpack.c.b16 %v724, %v720
    %v1017 = vpack.c.b16 %v725, %v721
    %v1018 = vpack.c.b16 %v726, %v722
    %v1019 = vpack.c.b16 %v731, %v727
    %v1020 = vpack.c.b16 %v732, %v728
    %v1021 = vpack.c.b16 %v733, %v729
    %v1022 = vpack.c.b16 %v734, %v730
    %v1023 = vpack.c.b16 %v739, %v735
    %v1024 = vpack.c.b16 %v740, %v736
    %v1025 = vpack.c.b16 %v741, %v737
    %v1026 = vpack.c.b16 %v742, %v738
    %v1027 = vpack.c.b16 %v747, %v743
    %v1028 = vpack.c.b16 %v748, %v744
    %v1029 = vpack.c.b16 %v749, %v745
    %v1030 = vpack.c.b16 %v750, %v746
    %v1031 = vpack.c.b16 %v755, %v751
    %v1032 = vpack.c.b16 %v756, %v752
    %v1033 = vpack.c.b16 %v757, %v753
    %v1034 = vpack.c.b16 %v758, %v754
    %v1035 = vpack.c.b16 %v763, %v759
    %v1036 = vpack.c.b16 %v764, %v760
    %v1037 = vpack.c.b16 %v765, %v761
    %v1038 = vpack.c.b16 %v766, %v762
    %v1039 = vpack.c.b16 %v771, %v767
    %v1040 = vpack.c.b16 %v772, %v768
    %v1041 = vpack.c.b16 %v773, %v769
    %v1042 = vpack.c.b16 %v774, %v770
    %v1043 = vpack.c.b16 %v779, %v775
    %v1044 = vpack.c.b16 %v780, %v776
    %v1045 = vpack.c.b16 %v781, %v777
    %v1046 = vpack.c.b16 %v782, %v778
    %v1047 = vpack.c.b16 %v787, %v783
    %v1048 = vpack.c.b16 %v788, %v784
    %v1049 = vpack.c.b16 %v789, %v785
    %v1050 = vpack.c.b16 %v790, %v786
    %v1051 = vpack.c.b16 %v795, %v791
    %v1052 = vpack.c.b16 %v796, %v792
    %v1053 = vpack.c.b16 %v797, %v793
    %v1054 = vpack.c.b16 %v798, %v794
    %v1055 = vpack.c.b16 %v803, %v799
    %v1056 = vpack.c.b16 %v804, %v800
    %v1057 = vpack.c.b16 %v805, %v801
    %v1058 = vpack.c.b16 %v806, %v802
    %v1059 = vpack.c.b16 %v811, %v807
    %v1060 = vpack.c.b16 %v812, %v808
    %v1061 = vpack.c.b16 %v813, %v809
    %v1062 = vpack.c.b16 %v814, %v810
    %v1063 = vpack.c.b16 %v819, %v815
    %v1064 = vpack.c.b16 %v820, %v816
    %v1065 = vpack.c.b16 %v821, %v817
    %v1066 = vpack.c.b16 %v822, %v818
    %v1067 = vpack.c.b16 %v827, %v823
    %v1068 = vpack.c.b16 %v828, %v824
    %v1069 = vpack.c.b16 %v829, %v825
    %v1070 = vpack.c.b16 %v830, %v826
    %v1071 = vpack.c.b16 %v835, %v831
    %v1072 = vpack.c.b16 %v836, %v832
    %v1073 = vpack.c.b16 %v837, %v833
    %v1074 = vpack.c.b16 %v838, %v834
    %v1075 = vpack.c.b16 %v843, %v839
    %v1076 = vpack.c.b16 %v844, %v840
    %v1077 = vpack.c.b16 %v845, %v841
    %v1078 = vpack.c.b16 %v846, %v842
    %v1079 = vpack.c.b16 %v851, %v847
    %v1080 = vpack.c.b16 %v852, %v848
    %v1081 = vpack.c.b16 %v853, %v849
    %v1082 = vpack.c.b16 %v854, %v850
    %v1083 = vpack.c.b16 %v859, %v855
    %v1084 = vpack.c.b16 %v860, %v856
    %v1085 = vpack.c.b16 %v861, %v857
    %v1086 = vpack.c.b16 %v862, %v858
    %v1087 = vpack.c.b16 %v867, %v863
    %v1088 = vpack.c.b16 %v868, %v864
    %v1089 = vpack.c.b16 %v869, %v865
    %v1090 = vpack.c.b16 %v870, %v866
    %v1091 = vpack.c.b16 %v875, %v871
    %v1092 = vpack.c.b16 %v876, %v872
    %v1093 = vpack.c.b16 %v877, %v873
    %v1094 = vpack.c.b16 %v878, %v874
    %v1095 = vpack.c.b16 %v883, %v879
    %v1096 = vpack.c.b16 %v884, %v880
    %v1097 = vpack.c.b16 %v885, %v881
    %v1098 = vpack.c.b16 %v886, %v882
    %v1099 = vpack.c.b16 %v891, %v887
    %v1100 = vpack.c.b16 %v892, %v888
    %v1101 = vpack.c.b16 %v893, %v889
    %v1102 = vpack.c.b16 %v894, %v890
    %v1103 = vpack.c.b16 %v899, %v895
    %v1104 = vpack.c.b16 %v900, %v896
    %v1105 = vpack.c.b16 %v901, %v897
    %v1106 = vpack.c.b16 %v902, %v898
    %v1107 = vpack.c.b16 %v907, %v903
    %v1108 = vpack.c.b16 %v908, %v904
    %v1109 = vpack.c.b16 %v909, %v905
    %v1110 = vpack.c.b16 %v910, %v906
    %v1111 = vpack.c.b16 %v915, %v911
    %v1112 = vpack.c.b16 %v916, %v912
    %v1113 = vpack.c.b16 %v917, %v913
    %v1114 = vpack.c.b16 %v918, %v914
    %vm1311 = vcmask 130048
    %v1313 = vsel %vm1311, %v124, 0
    %1315 = vmatpush.bf16.msra.mxu0 %v947
    %1316 = vmatpush.bf16.msra.mxu0 %v943
    %1317 = vmatpush.bf16.msra.mxu0 %v939
    %1318 = vmatpush.bf16.msra.mxu0 %v935
    %1319 = vmatpush.bf16.msra.mxu0 %v931
    %1320 = vmatpush.bf16.msra.mxu0 %v927
    %1321 = vmatpush.bf16.msra.mxu0 %v923
    %1322 = vmatpush.bf16.msra.mxu0 %v919
    %1323 = vmatmul.bf16.gmra.mxu0 %v118
    %v1324 = vpop.f32.mrf.mxu0
    %v1325 = vadd.f32 %v323, %v1324
    %v1326 = vpop.f32.mrf.mxu0
    %v1327 = vadd.f32 %v323, %v1326
    %1328 = vdwg.mxu0
    %1329 = vmatpush.bf16.msra.mxu0 %v979
    %1330 = vmatpush.bf16.msra.mxu0 %v975
    %1331 = vmatpush.bf16.msra.mxu0 %v971
    %1332 = vmatpush.bf16.msra.mxu0 %v967
    %1333 = vmatpush.bf16.msra.mxu0 %v963
    %1334 = vmatpush.bf16.msra.mxu0 %v959
    %1335 = vmatpush.bf16.msra.mxu0 %v955
    %1336 = vmatpush.bf16.msra.mxu0 %v951
    %1337 = vmatmul.bf16.gmra.mxu0 %v119
    %v1338 = vpop.f32.mrf.mxu0
    %v1339 = vadd.f32 %v1325, %v1338
    %v1340 = vpop.f32.mrf.mxu0
    %v1341 = vadd.f32 %v1327, %v1340
    %1342 = vdwg.mxu0
    %1343 = vmatpush.bf16.msra.mxu0 %v1011
    %1344 = vmatpush.bf16.msra.mxu0 %v1007
    %1345 = vmatpush.bf16.msra.mxu0 %v1003
    %1346 = vmatpush.bf16.msra.mxu0 %v999
    %1347 = vmatpush.bf16.msra.mxu0 %v995
    %1348 = vmatpush.bf16.msra.mxu0 %v991
    %1349 = vmatpush.bf16.msra.mxu0 %v987
    %1350 = vmatpush.bf16.msra.mxu0 %v983
    %1351 = vmatmul.bf16.gmra.mxu0 %v120
    %v1352 = vpop.f32.mrf.mxu0
    %v1353 = vadd.f32 %v1339, %v1352
    %v1354 = vpop.f32.mrf.mxu0
    %v1355 = vadd.f32 %v1341, %v1354
    %1356 = vdwg.mxu0
    %1357 = vmatpush.bf16.msra.mxu0 %v1043
    %1358 = vmatpush.bf16.msra.mxu0 %v1039
    %1359 = vmatpush.bf16.msra.mxu0 %v1035
    %1360 = vmatpush.bf16.msra.mxu0 %v1031
    %1361 = vmatpush.bf16.msra.mxu0 %v1027
    %1362 = vmatpush.bf16.msra.mxu0 %v1023
    %1363 = vmatpush.bf16.msra.mxu0 %v1019
    %1364 = vmatpush.bf16.msra.mxu0 %v1015
    %1365 = vmatmul.bf16.gmra.mxu0 %v121
    %v1366 = vpop.f32.mrf.mxu0
    %v1367 = vadd.f32 %v1353, %v1366
    %v1368 = vpop.f32.mrf.mxu0
    %v1369 = vadd.f32 %v1355, %v1368
    %1370 = vdwg.mxu0
    %1371 = vmatpush.bf16.msra.mxu0 %v1075
    %1372 = vmatpush.bf16.msra.mxu0 %v1071
    %1373 = vmatpush.bf16.msra.mxu0 %v1067
    %1374 = vmatpush.bf16.msra.mxu0 %v1063
    %1375 = vmatpush.bf16.msra.mxu0 %v1059
    %1376 = vmatpush.bf16.msra.mxu0 %v1055
    %1377 = vmatpush.bf16.msra.mxu0 %v1051
    %1378 = vmatpush.bf16.msra.mxu0 %v1047
    %1379 = vmatmul.bf16.gmra.mxu0 %v122
    %v1380 = vpop.f32.mrf.mxu0
    %v1381 = vadd.f32 %v1367, %v1380
    %v1382 = vpop.f32.mrf.mxu0
    %v1383 = vadd.f32 %v1369, %v1382
    %1384 = vdwg.mxu0
    %1385 = vmatpush.bf16.msra.mxu0 %v1107
    %1386 = vmatpush.bf16.msra.mxu0 %v1103
    %1387 = vmatpush.bf16.msra.mxu0 %v1099
    %1388 = vmatpush.bf16.msra.mxu0 %v1095
    %1389 = vmatpush.bf16.msra.mxu0 %v1091
    %1390 = vmatpush.bf16.msra.mxu0 %v1087
    %1391 = vmatpush.bf16.msra.mxu0 %v1083
    %1392 = vmatpush.bf16.msra.mxu0 %v1079
    %1393 = vmatmul.bf16.gmra.mxu0 %v123
    %v1394 = vpop.f32.mrf.mxu0
    %v1395 = vadd.f32 %v1381, %v1394
    %v1396 = vpop.f32.mrf.mxu0
    %v1397 = vadd.f32 %v1383, %v1396
    %1398 = vdwg.mxu0
    %1399 = vmatpush.bf16.msra.mxu0 0
    %1400 = vmatpush.bf16.msra.mxu0 0
    %1401 = vmatpush.bf16.msra.mxu0 0
    %1402 = vmatpush.bf16.msra.mxu0 0
    %1403 = vmatpush.bf16.msra.mxu0 0
    %1404 = vmatpush.bf16.msra.mxu0 0
    %1405 = vmatpush.bf16.msra.mxu0 0
    %1406 = vmatpush.bf16.msra.mxu0 %v1111
    %1407 = vmatmul.bf16.gmra.mxu0 %v1313
    %v1408 = vpop.f32.mrf.mxu0
    %v1409 = vadd.f32 %v1395, %v1408
    %v1410 = vpop.f32.mrf.mxu0
    %v1411 = vadd.f32 %v1397, %v1410
    %1412 = vdwg.mxu0
    %1413 = vmatpush.bf16.msra.mxu0 %v948
    %1414 = vmatpush.bf16.msra.mxu0 %v944
    %1415 = vmatpush.bf16.msra.mxu0 %v940
    %1416 = vmatpush.bf16.msra.mxu0 %v936
    %1417 = vmatpush.bf16.msra.mxu0 %v932
    %1418 = vmatpush.bf16.msra.mxu0 %v928
    %1419 = vmatpush.bf16.msra.mxu0 %v924
    %1420 = vmatpush.bf16.msra.mxu0 %v920
    %1421 = vmatmul.bf16.gmra.mxu0 %v118
    %v1422 = vpop.f32.mrf.mxu0
    %v1423 = vadd.f32 %v324, %v1422
    %v1424 = vpop.f32.mrf.mxu0
    %v1425 = vadd.f32 %v324, %v1424
    %1426 = vdwg.mxu0
    %1427 = vmatpush.bf16.msra.mxu0 %v980
    %1428 = vmatpush.bf16.msra.mxu0 %v976
    %1429 = vmatpush.bf16.msra.mxu0 %v972
    %1430 = vmatpush.bf16.msra.mxu0 %v968
    %1431 = vmatpush.bf16.msra.mxu0 %v964
    %1432 = vmatpush.bf16.msra.mxu0 %v960
    %1433 = vmatpush.bf16.msra.mxu0 %v956
    %1434 = vmatpush.bf16.msra.mxu0 %v952
    %1435 = vmatmul.bf16.gmra.mxu0 %v119
    %v1436 = vpop.f32.mrf.mxu0
    %v1437 = vadd.f32 %v1423, %v1436
    %v1438 = vpop.f32.mrf.mxu0
    %v1439 = vadd.f32 %v1425, %v1438
    %1440 = vdwg.mxu0
    %1441 = vmatpush.bf16.msra.mxu0 %v1012
    %1442 = vmatpush.bf16.msra.mxu0 %v1008
    %1443 = vmatpush.bf16.msra.mxu0 %v1004
    %1444 = vmatpush.bf16.msra.mxu0 %v1000
    %1445 = vmatpush.bf16.msra.mxu0 %v996
    %1446 = vmatpush.bf16.msra.mxu0 %v992
    %1447 = vmatpush.bf16.msra.mxu0 %v988
    %1448 = vmatpush.bf16.msra.mxu0 %v984
    %1449 = vmatmul.bf16.gmra.mxu0 %v120
    %v1450 = vpop.f32.mrf.mxu0
    %v1451 = vadd.f32 %v1437, %v1450
    %v1452 = vpop.f32.mrf.mxu0
    %v1453 = vadd.f32 %v1439, %v1452
    %1454 = vdwg.mxu0
    %1455 = vmatpush.bf16.msra.mxu0 %v1044
    %1456 = vmatpush.bf16.msra.mxu0 %v1040
    %1457 = vmatpush.bf16.msra.mxu0 %v1036
    %1458 = vmatpush.bf16.msra.mxu0 %v1032
    %1459 = vmatpush.bf16.msra.mxu0 %v1028
    %1460 = vmatpush.bf16.msra.mxu0 %v1024
    %1461 = vmatpush.bf16.msra.mxu0 %v1020
    %1462 = vmatpush.bf16.msra.mxu0 %v1016
    %1463 = vmatmul.bf16.gmra.mxu0 %v121
    %v1464 = vpop.f32.mrf.mxu0
    %v1465 = vadd.f32 %v1451, %v1464
    %v1466 = vpop.f32.mrf.mxu0
    %v1467 = vadd.f32 %v1453, %v1466
    %1468 = vdwg.mxu0
    %1469 = vmatpush.bf16.msra.mxu0 %v1076
    %1470 = vmatpush.bf16.msra.mxu0 %v1072
    %1471 = vmatpush.bf16.msra.mxu0 %v1068
    %1472 = vmatpush.bf16.msra.mxu0 %v1064
    %1473 = vmatpush.bf16.msra.mxu0 %v1060
    %1474 = vmatpush.bf16.msra.mxu0 %v1056
    %1475 = vmatpush.bf16.msra.mxu0 %v1052
    %1476 = vmatpush.bf16.msra.mxu0 %v1048
    %1477 = vmatmul.bf16.gmra.mxu0 %v122
    %v1478 = vpop.f32.mrf.mxu0
    %v1479 = vadd.f32 %v1465, %v1478
    %v1480 = vpop.f32.mrf.mxu0
    %v1481 = vadd.f32 %v1467, %v1480
    %1482 = vdwg.mxu0
    %1483 = vmatpush.bf16.msra.mxu0 %v1108
    %1484 = vmatpush.bf16.msra.mxu0 %v1104
    %1485 = vmatpush.bf16.msra.mxu0 %v1100
    %1486 = vmatpush.bf16.msra.mxu0 %v1096
    %1487 = vmatpush.bf16.msra.mxu0 %v1092
    %1488 = vmatpush.bf16.msra.mxu0 %v1088
    %1489 = vmatpush.bf16.msra.mxu0 %v1084
    %1490 = vmatpush.bf16.msra.mxu0 %v1080
    %1491 = vmatmul.bf16.gmra.mxu0 %v123
    %v1492 = vpop.f32.mrf.mxu0
    %v1493 = vadd.f32 %v1479, %v1492
    %v1494 = vpop.f32.mrf.mxu0
    %v1495 = vadd.f32 %v1481, %v1494
    %1496 = vdwg.mxu0
    %1497 = vmatpush.bf16.msra.mxu0 0
    %1498 = vmatpush.bf16.msra.mxu0 0
    %1499 = vmatpush.bf16.msra.mxu0 0
    %1500 = vmatpush.bf16.msra.mxu0 0
    %1501 = vmatpush.bf16.msra.mxu0 0
    %1502 = vmatpush.bf16.msra.mxu0 0
    %1503 = vmatpush.bf16.msra.mxu0 0
    %1504 = vmatpush.bf16.msra.mxu0 %v1112
    %1505 = vmatmul.bf16.gmra.mxu0 %v1313
    %v1506 = vpop.f32.mrf.mxu0
    %v1507 = vadd.f32 %v1493, %v1506
    %v1508 = vpop.f32.mrf.mxu0
    %v1509 = vadd.f32 %v1495, %v1508
    %1510 = vdwg.mxu0
    %1511 = vmatpush.bf16.msra.mxu0 %v949
    %1512 = vmatpush.bf16.msra.mxu0 %v945
    %1513 = vmatpush.bf16.msra.mxu0 %v941
    %1514 = vmatpush.bf16.msra.mxu0 %v937
    %1515 = vmatpush.bf16.msra.mxu0 %v933
    %1516 = vmatpush.bf16.msra.mxu0 %v929
    %1517 = vmatpush.bf16.msra.mxu0 %v925
    %1518 = vmatpush.bf16.msra.mxu0 %v921
    %1519 = vmatmul.bf16.gmra.mxu0 %v118
    %v1520 = vpop.f32.mrf.mxu0
    %v1521 = vadd.f32 %v325, %v1520
    %v1522 = vpop.f32.mrf.mxu0
    %v1523 = vadd.f32 %v325, %v1522
    %1524 = vdwg.mxu0
    %1525 = vmatpush.bf16.msra.mxu0 %v981
    %1526 = vmatpush.bf16.msra.mxu0 %v977
    %1527 = vmatpush.bf16.msra.mxu0 %v973
    %1528 = vmatpush.bf16.msra.mxu0 %v969
    %1529 = vmatpush.bf16.msra.mxu0 %v965
    %1530 = vmatpush.bf16.msra.mxu0 %v961
    %1531 = vmatpush.bf16.msra.mxu0 %v957
    %1532 = vmatpush.bf16.msra.mxu0 %v953
    %1533 = vmatmul.bf16.gmra.mxu0 %v119
    %v1534 = vpop.f32.mrf.mxu0
    %v1535 = vadd.f32 %v1521, %v1534
    %v1536 = vpop.f32.mrf.mxu0
    %v1537 = vadd.f32 %v1523, %v1536
    %1538 = vdwg.mxu0
    %1539 = vmatpush.bf16.msra.mxu0 %v1013
    %1540 = vmatpush.bf16.msra.mxu0 %v1009
    %1541 = vmatpush.bf16.msra.mxu0 %v1005
    %1542 = vmatpush.bf16.msra.mxu0 %v1001
    %1543 = vmatpush.bf16.msra.mxu0 %v997
    %1544 = vmatpush.bf16.msra.mxu0 %v993
    %1545 = vmatpush.bf16.msra.mxu0 %v989
    %1546 = vmatpush.bf16.msra.mxu0 %v985
    %1547 = vmatmul.bf16.gmra.mxu0 %v120
    %v1548 = vpop.f32.mrf.mxu0
    %v1549 = vadd.f32 %v1535, %v1548
    %v1550 = vpop.f32.mrf.mxu0
    %v1551 = vadd.f32 %v1537, %v1550
    %1552 = vdwg.mxu0
    %1553 = vmatpush.bf16.msra.mxu0 %v1045
    %1554 = vmatpush.bf16.msra.mxu0 %v1041
    %1555 = vmatpush.bf16.msra.mxu0 %v1037
    %1556 = vmatpush.bf16.msra.mxu0 %v1033
    %1557 = vmatpush.bf16.msra.mxu0 %v1029
    %1558 = vmatpush.bf16.msra.mxu0 %v1025
    %1559 = vmatpush.bf16.msra.mxu0 %v1021
    %1560 = vmatpush.bf16.msra.mxu0 %v1017
    %1561 = vmatmul.bf16.gmra.mxu0 %v121
    %v1562 = vpop.f32.mrf.mxu0
    %v1563 = vadd.f32 %v1549, %v1562
    %v1564 = vpop.f32.mrf.mxu0
    %v1565 = vadd.f32 %v1551, %v1564
    %1566 = vdwg.mxu0
    %1567 = vmatpush.bf16.msra.mxu0 %v1077
    %1568 = vmatpush.bf16.msra.mxu0 %v1073
    %1569 = vmatpush.bf16.msra.mxu0 %v1069
    %1570 = vmatpush.bf16.msra.mxu0 %v1065
    %1571 = vmatpush.bf16.msra.mxu0 %v1061
    %1572 = vmatpush.bf16.msra.mxu0 %v1057
    %1573 = vmatpush.bf16.msra.mxu0 %v1053
    %1574 = vmatpush.bf16.msra.mxu0 %v1049
    %1575 = vmatmul.bf16.gmra.mxu0 %v122
    %v1576 = vpop.f32.mrf.mxu0
    %v1577 = vadd.f32 %v1563, %v1576
    %v1578 = vpop.f32.mrf.mxu0
    %v1579 = vadd.f32 %v1565, %v1578
    %1580 = vdwg.mxu0
    %1581 = vmatpush.bf16.msra.mxu0 %v1109
    %1582 = vmatpush.bf16.msra.mxu0 %v1105
    %1583 = vmatpush.bf16.msra.mxu0 %v1101
    %1584 = vmatpush.bf16.msra.mxu0 %v1097
    %1585 = vmatpush.bf16.msra.mxu0 %v1093
    %1586 = vmatpush.bf16.msra.mxu0 %v1089
    %1587 = vmatpush.bf16.msra.mxu0 %v1085
    %1588 = vmatpush.bf16.msra.mxu0 %v1081
    %1589 = vmatmul.bf16.gmra.mxu0 %v123
    %v1590 = vpop.f32.mrf.mxu0
    %v1591 = vadd.f32 %v1577, %v1590
    %v1592 = vpop.f32.mrf.mxu0
    %v1593 = vadd.f32 %v1579, %v1592
    %1594 = vdwg.mxu0
    %1595 = vmatpush.bf16.msra.mxu0 0
    %1596 = vmatpush.bf16.msra.mxu0 0
    %1597 = vmatpush.bf16.msra.mxu0 0
    %1598 = vmatpush.bf16.msra.mxu0 0
    %1599 = vmatpush.bf16.msra.mxu0 0
    %1600 = vmatpush.bf16.msra.mxu0 0
    %1601 = vmatpush.bf16.msra.mxu0 0
    %1602 = vmatpush.bf16.msra.mxu0 %v1113
    %1603 = vmatmul.bf16.gmra.mxu0 %v1313
    %v1604 = vpop.f32.mrf.mxu0
    %v1605 = vadd.f32 %v1591, %v1604
    %v1606 = vpop.f32.mrf.mxu0
    %v1607 = vadd.f32 %v1593, %v1606
    %1608 = vdwg.mxu0
    %1609 = vmatpush.bf16.msra.mxu0 %v950
    %1610 = vmatpush.bf16.msra.mxu0 %v946
    %1611 = vmatpush.bf16.msra.mxu0 %v942
    %1612 = vmatpush.bf16.msra.mxu0 %v938
    %1613 = vmatpush.bf16.msra.mxu0 %v934
    %1614 = vmatpush.bf16.msra.mxu0 %v930
    %1615 = vmatpush.bf16.msra.mxu0 %v926
    %1616 = vmatpush.bf16.msra.mxu0 %v922
    %1617 = vmatmul.bf16.gmra.mxu0 %v118
    %v1618 = vpop.f32.mrf.mxu0
    %v1619 = vadd.f32 %v326, %v1618
    %v1620 = vpop.f32.mrf.mxu0
    %v1621 = vadd.f32 %v326, %v1620
    %1622 = vdwg.mxu0
    %1623 = vmatpush.bf16.msra.mxu0 %v982
    %1624 = vmatpush.bf16.msra.mxu0 %v978
    %1625 = vmatpush.bf16.msra.mxu0 %v974
    %1626 = vmatpush.bf16.msra.mxu0 %v970
    %1627 = vmatpush.bf16.msra.mxu0 %v966
    %1628 = vmatpush.bf16.msra.mxu0 %v962
    %1629 = vmatpush.bf16.msra.mxu0 %v958
    %1630 = vmatpush.bf16.msra.mxu0 %v954
    %1631 = vmatmul.bf16.gmra.mxu0 %v119
    %v1632 = vpop.f32.mrf.mxu0
    %v1633 = vadd.f32 %v1619, %v1632
    %v1634 = vpop.f32.mrf.mxu0
    %v1635 = vadd.f32 %v1621, %v1634
    %1636 = vdwg.mxu0
    %1637 = vmatpush.bf16.msra.mxu0 %v1014
    %1638 = vmatpush.bf16.msra.mxu0 %v1010
    %1639 = vmatpush.bf16.msra.mxu0 %v1006
    %1640 = vmatpush.bf16.msra.mxu0 %v1002
    %1641 = vmatpush.bf16.msra.mxu0 %v998
    %1642 = vmatpush.bf16.msra.mxu0 %v994
    %1643 = vmatpush.bf16.msra.mxu0 %v990
    %1644 = vmatpush.bf16.msra.mxu0 %v986
    %1645 = vmatmul.bf16.gmra.mxu0 %v120
    %v1646 = vpop.f32.mrf.mxu0
    %v1647 = vadd.f32 %v1633, %v1646
    %v1648 = vpop.f32.mrf.mxu0
    %v1649 = vadd.f32 %v1635, %v1648
    %1650 = vdwg.mxu0
    %1651 = vmatpush.bf16.msra.mxu0 %v1046
    %1652 = vmatpush.bf16.msra.mxu0 %v1042
    %1653 = vmatpush.bf16.msra.mxu0 %v1038
    %1654 = vmatpush.bf16.msra.mxu0 %v1034
    %1655 = vmatpush.bf16.msra.mxu0 %v1030
    %1656 = vmatpush.bf16.msra.mxu0 %v1026
    %1657 = vmatpush.bf16.msra.mxu0 %v1022
    %1658 = vmatpush.bf16.msra.mxu0 %v1018
    %1659 = vmatmul.bf16.gmra.mxu0 %v121
    %v1660 = vpop.f32.mrf.mxu0
    %v1661 = vadd.f32 %v1647, %v1660
    %v1662 = vpop.f32.mrf.mxu0
    %v1663 = vadd.f32 %v1649, %v1662
    %1664 = vdwg.mxu0
    %1665 = vmatpush.bf16.msra.mxu0 %v1078
    %1666 = vmatpush.bf16.msra.mxu0 %v1074
    %1667 = vmatpush.bf16.msra.mxu0 %v1070
    %1668 = vmatpush.bf16.msra.mxu0 %v1066
    %1669 = vmatpush.bf16.msra.mxu0 %v1062
    %1670 = vmatpush.bf16.msra.mxu0 %v1058
    %1671 = vmatpush.bf16.msra.mxu0 %v1054
    %1672 = vmatpush.bf16.msra.mxu0 %v1050
    %1673 = vmatmul.bf16.gmra.mxu0 %v122
    %v1674 = vpop.f32.mrf.mxu0
    %v1675 = vadd.f32 %v1661, %v1674
    %v1676 = vpop.f32.mrf.mxu0
    %v1677 = vadd.f32 %v1663, %v1676
    %1678 = vdwg.mxu0
    %1679 = vmatpush.bf16.msra.mxu0 %v1110
    %1680 = vmatpush.bf16.msra.mxu0 %v1106
    %1681 = vmatpush.bf16.msra.mxu0 %v1102
    %1682 = vmatpush.bf16.msra.mxu0 %v1098
    %1683 = vmatpush.bf16.msra.mxu0 %v1094
    %1684 = vmatpush.bf16.msra.mxu0 %v1090
    %1685 = vmatpush.bf16.msra.mxu0 %v1086
    %1686 = vmatpush.bf16.msra.mxu0 %v1082
    %1687 = vmatmul.bf16.gmra.mxu0 %v123
    %v1688 = vpop.f32.mrf.mxu0
    %v1689 = vadd.f32 %v1675, %v1688
    %v1690 = vpop.f32.mrf.mxu0
    %v1691 = vadd.f32 %v1677, %v1690
    %1692 = vdwg.mxu0
    %1693 = vmatpush.bf16.msra.mxu0 0
    %1694 = vmatpush.bf16.msra.mxu0 0
    %1695 = vmatpush.bf16.msra.mxu0 0
    %1696 = vmatpush.bf16.msra.mxu0 0
    %1697 = vmatpush.bf16.msra.mxu0 0
    %1698 = vmatpush.bf16.msra.mxu0 0
    %1699 = vmatpush.bf16.msra.mxu0 0
    %1700 = vmatpush.bf16.msra.mxu0 %v1114
    %1701 = vmatmul.bf16.gmra.mxu0 %v1313
    %v1702 = vpop.f32.mrf.mxu0
    %v1703 = vadd.f32 %v1689, %v1702
    %v1704 = vpop.f32.mrf.mxu0
    %v1705 = vadd.f32 %v1691, %v1704
    %1706 = vdwg.mxu0
    %v1707 = vmax.f32 %v1409, 0.0
    %v1708 = vmax.f32 %v1507, 0.0
    %v1709 = vmax.f32 %v1605, 0.0
    %v1710 = vmax.f32 %v1703, 0.0
    %v1711 = vmax.f32 %v1411, 0.0
    %v1712 = vmax.f32 %v1509, 0.0
    %v1713 = vmax.f32 %v1607, 0.0
    %v1714 = vmax.f32 %v1705, 0.0
    %v1715 = vpack.c.bf16 %v1711, %v1707
    %v1716 = vpack.c.bf16 %v1712, %v1708
    %v1717 = vpack.c.bf16 %v1713, %v1709
    %v1718 = vpack.c.bf16 %v1714, %v1710
    %v1719 = vld [vmem:[#allocation8] sm:$0xff]
    %v1720 = vld [vmem:[#allocation8 + $0x8] sm:$0xff]
    %v1721 = vld [vmem:[#allocation8 + $0x10] sm:$0xff]
    %v1722 = vld [vmem:[#allocation8 + $0x18] sm:$0xff]
    %v1723 = vld [vmem:[#allocation8 + $0x20] sm:$0xff]
    %v1724 = vld [vmem:[#allocation8 + $0x28] sm:$0xff]
    %v1725 = vld [vmem:[#allocation8 + $0x30] sm:$0xff]
    %v1726 = vld [vmem:[#allocation8 + $0x38] sm:$0xff]
    %v1727 = vld [vmem:[#allocation8 + $0x40] sm:$0xff]
    %v1728 = vld [vmem:[#allocation8 + $0x48] sm:$0xff]
    %v1729 = vld [vmem:[#allocation8 + $0x50] sm:$0xff]
    %v1730 = vld [vmem:[#allocation8 + $0x58] sm:$0xff]
    %v1731 = vld [vmem:[#allocation8 + $0x60] sm:$0xff]
    %v1732 = vld [vmem:[#allocation8 + $0x68] sm:$0xff]
    %v1733 = vld [vmem:[#allocation8 + $0x70] sm:$0xff]
    %v1734 = vld [vmem:[#allocation8 + $0x78] sm:$0xff]
    %v1735 = vld [vmem:[#allocation8 + $0x80] sm:$0xff]
    %v1736 = vld [vmem:[#allocation8 + $0x88] sm:$0xff]
    %v1737 = vld [vmem:[#allocation8 + $0x90] sm:$0xff]
    %v1738 = vld [vmem:[#allocation8 + $0x98] sm:$0xff]
    %v1739 = vld [vmem:[#allocation8 + $0xa0] sm:$0xff]
    %v1740 = vld [vmem:[#allocation8 + $0xa8] sm:$0xff]
    %v1741 = vld [vmem:[#allocation8 + $0xb0] sm:$0xff]
    %v1742 = vld [vmem:[#allocation8 + $0xb8] sm:$0xff]
    %v1743 = vld [vmem:[#allocation8 + $0xc0] sm:$0xff]
    %v1744 = vld [vmem:[#allocation8 + $0xc8] sm:$0xff]
    %v1745 = vld [vmem:[#allocation8 + $0xd0] sm:$0xff]
    %v1746 = vld [vmem:[#allocation8 + $0xd8] sm:$0xff]
    %v1747 = vld [vmem:[#allocation8 + $0xe0] sm:$0xff]
    %v1748 = vld [vmem:[#allocation8 + $0xe8] sm:$0xff]
    %v1749 = vld [vmem:[#allocation8 + $0xf0] sm:$0xff]
    %v1750 = vld [vmem:[#allocation8 + $0xf8] sm:$0xff]
    %v1751 = vld [vmem:[#allocation8 + $0x100] sm:$0xff]
    %v1752 = vld [vmem:[#allocation8 + $0x108] sm:$0xff]
    %v1753 = vld [vmem:[#allocation8 + $0x110] sm:$0xff]
    %v1754 = vld [vmem:[#allocation8 + $0x118] sm:$0xff]
    %v1755 = vld [vmem:[#allocation8 + $0x120] sm:$0xff]
    %v1756 = vld [vmem:[#allocation8 + $0x128] sm:$0xff]
    %v1757 = vld [vmem:[#allocation8 + $0x130] sm:$0xff]
    %v1758 = vld [vmem:[#allocation8 + $0x138] sm:$0xff]
    %v1759 = vld [vmem:[#allocation8 + $0x140] sm:$0xff]
    %v1760 = vld [vmem:[#allocation8 + $0x148] sm:$0xff]
    %v1761 = vld [vmem:[#allocation8 + $0x150] sm:$0xff]
    %v1762 = vld [vmem:[#allocation8 + $0x158] sm:$0xff]
    %v1763 = vld [vmem:[#allocation8 + $0x160] sm:$0xff]
    %v1764 = vld [vmem:[#allocation8 + $0x168] sm:$0xff]
    %v1765 = vld [vmem:[#allocation8 + $0x170] sm:$0xff]
    %v1766 = vld [vmem:[#allocation8 + $0x178] sm:$0xff]
    %v1767 = vld [vmem:[#allocation8 + $0x180] sm:$0xff]
    %v1768 = vld [vmem:[#allocation8 + $0x188] sm:$0xff]
    %v1769 = vld [vmem:[#allocation8 + $0x190] sm:$0xff]
    %v1770 = vld [vmem:[#allocation8 + $0x198] sm:$0xff]
    %v1771 = vld [vmem:[#allocation8 + $0x1a0] sm:$0xff]
    %v1772 = vld [vmem:[#allocation8 + $0x1a8] sm:$0xff]
    %v1773 = vld [vmem:[#allocation8 + $0x1b0] sm:$0xff]
    %v1774 = vld [vmem:[#allocation8 + $0x1b8] sm:$0xff]
    %v1775 = vld [vmem:[#allocation8 + $0x1c0] sm:$0xff]
    %v1776 = vld [vmem:[#allocation8 + $0x1c8] sm:$0xff]
    %v1777 = vld [vmem:[#allocation8 + $0x1d0] sm:$0xff]
    %v1778 = vld [vmem:[#allocation8 + $0x1d8] sm:$0xff]
    %v1779 = vld [vmem:[#allocation8 + $0x1e0] sm:$0xff]
    %v1780 = vld [vmem:[#allocation8 + $0x1e8] sm:$0xff]
    %v1781 = vld [vmem:[#allocation8 + $0x1f0] sm:$0xff]
    %v1782 = vld [vmem:[#allocation8 + $0x1f8] sm:$0xff]
    %v1783 = vld [vmem:[%s4] sm:$0x3]
    %v1785 = vperm.slane %v1783, 0
    %v1786 = vperm.slane %v1783, 1
    %v1853 = vunpack.c.l.b16 %v1719
    %v1854 = vunpack.c.h.b16 %v1719
    %v1855 = vunpack.c.l.b16 %v1720
    %v1856 = vunpack.c.h.b16 %v1720
    %v1857 = vunpack.c.l.b16 %v1721
    %v1858 = vunpack.c.h.b16 %v1721
    %v1859 = vunpack.c.l.b16 %v1722
    %v1860 = vunpack.c.h.b16 %v1722
    %v1861 = vunpack.c.l.b16 %v1723
    %v1862 = vunpack.c.h.b16 %v1723
    %v1863 = vunpack.c.l.b16 %v1724
    %v1864 = vunpack.c.h.b16 %v1724
    %v1865 = vunpack.c.l.b16 %v1725
    %v1866 = vunpack.c.h.b16 %v1725
    %v1867 = vunpack.c.l.b16 %v1726
    %v1868 = vunpack.c.h.b16 %v1726
    %v1869 = vunpack.c.l.b16 %v1727
    %v1870 = vunpack.c.h.b16 %v1727
    %v1871 = vunpack.c.l.b16 %v1728
    %v1872 = vunpack.c.h.b16 %v1728
    %v1873 = vunpack.c.l.b16 %v1729
    %v1874 = vunpack.c.h.b16 %v1729
    %v1875 = vunpack.c.l.b16 %v1730
    %v1876 = vunpack.c.h.b16 %v1730
    %v1877 = vunpack.c.l.b16 %v1731
    %v1878 = vunpack.c.h.b16 %v1731
    %v1879 = vunpack.c.l.b16 %v1732
    %v1880 = vunpack.c.h.b16 %v1732
    %v1881 = vunpack.c.l.b16 %v1733
    %v1882 = vunpack.c.h.b16 %v1733
    %v1883 = vunpack.c.l.b16 %v1734
    %v1884 = vunpack.c.h.b16 %v1734
    %v1885 = vunpack.c.l.b16 %v1735
    %v1886 = vunpack.c.h.b16 %v1735
    %v1887 = vunpack.c.l.b16 %v1736
    %v1888 = vunpack.c.h.b16 %v1736
    %v1889 = vunpack.c.l.b16 %v1737
    %v1890 = vunpack.c.h.b16 %v1737
    %v1891 = vunpack.c.l.b16 %v1738
    %v1892 = vunpack.c.h.b16 %v1738
    %v1893 = vunpack.c.l.b16 %v1739
    %v1894 = vunpack.c.h.b16 %v1739
    %v1895 = vunpack.c.l.b16 %v1740
    %v1896 = vunpack.c.h.b16 %v1740
    %v1897 = vunpack.c.l.b16 %v1741
    %v1898 = vunpack.c.h.b16 %v1741
    %v1899 = vunpack.c.l.b16 %v1742
    %v1900 = vunpack.c.h.b16 %v1742
    %v1901 = vunpack.c.l.b16 %v1743
    %v1902 = vunpack.c.h.b16 %v1743
    %v1903 = vunpack.c.l.b16 %v1744
    %v1904 = vunpack.c.h.b16 %v1744
    %v1905 = vunpack.c.l.b16 %v1745
    %v1906 = vunpack.c.h.b16 %v1745
    %v1907 = vunpack.c.l.b16 %v1746
    %v1908 = vunpack.c.h.b16 %v1746
    %v1909 = vunpack.c.l.b16 %v1747
    %v1910 = vunpack.c.h.b16 %v1747
    %v1911 = vunpack.c.l.b16 %v1748
    %v1912 = vunpack.c.h.b16 %v1748
    %v1913 = vunpack.c.l.b16 %v1749
    %v1914 = vunpack.c.h.b16 %v1749
    %v1915 = vunpack.c.l.b16 %v1750
    %v1916 = vunpack.c.h.b16 %v1750
    %v1917 = vunpack.c.l.b16 %v1751
    %v1918 = vunpack.c.h.b16 %v1751
    %v1919 = vunpack.c.l.b16 %v1752
    %v1920 = vunpack.c.h.b16 %v1752
    %v1921 = vunpack.c.l.b16 %v1753
    %v1922 = vunpack.c.h.b16 %v1753
    %v1923 = vunpack.c.l.b16 %v1754
    %v1924 = vunpack.c.h.b16 %v1754
    %v1925 = vunpack.c.l.b16 %v1755
    %v1926 = vunpack.c.h.b16 %v1755
    %v1927 = vunpack.c.l.b16 %v1756
    %v1928 = vunpack.c.h.b16 %v1756
    %v1929 = vunpack.c.l.b16 %v1757
    %v1930 = vunpack.c.h.b16 %v1757
    %v1931 = vunpack.c.l.b16 %v1758
    %v1932 = vunpack.c.h.b16 %v1758
    %v1933 = vunpack.c.l.b16 %v1759
    %v1934 = vunpack.c.h.b16 %v1759
    %v1935 = vunpack.c.l.b16 %v1760
    %v1936 = vunpack.c.h.b16 %v1760
    %v1937 = vunpack.c.l.b16 %v1761
    %v1938 = vunpack.c.h.b16 %v1761
    %v1939 = vunpack.c.l.b16 %v1762
    %v1940 = vunpack.c.h.b16 %v1762
    %v1941 = vunpack.c.l.b16 %v1763
    %v1942 = vunpack.c.h.b16 %v1763
    %v1943 = vunpack.c.l.b16 %v1764
    %v1944 = vunpack.c.h.b16 %v1764
    %v1945 = vunpack.c.l.b16 %v1765
    %v1946 = vunpack.c.h.b16 %v1765
    %v1947 = vunpack.c.l.b16 %v1766
    %v1948 = vunpack.c.h.b16 %v1766
    %v1949 = vunpack.c.l.b16 %v1767
    %v1950 = vunpack.c.h.b16 %v1767
    %v1951 = vunpack.c.l.b16 %v1768
    %v1952 = vunpack.c.h.b16 %v1768
    %v1953 = vunpack.c.l.b16 %v1769
    %v1954 = vunpack.c.h.b16 %v1769
    %v1955 = vunpack.c.l.b16 %v1770
    %v1956 = vunpack.c.h.b16 %v1770
    %v1957 = vunpack.c.l.b16 %v1771
    %v1958 = vunpack.c.h.b16 %v1771
    %v1959 = vunpack.c.l.b16 %v1772
    %v1960 = vunpack.c.h.b16 %v1772
    %v1961 = vunpack.c.l.b16 %v1773
    %v1962 = vunpack.c.h.b16 %v1773
    %v1963 = vunpack.c.l.b16 %v1774
    %v1964 = vunpack.c.h.b16 %v1774
    %v1965 = vunpack.c.l.b16 %v1775
    %v1966 = vunpack.c.h.b16 %v1775
    %v1967 = vunpack.c.l.b16 %v1776
    %v1968 = vunpack.c.h.b16 %v1776
    %v1969 = vunpack.c.l.b16 %v1777
    %v1970 = vunpack.c.h.b16 %v1777
    %v1971 = vunpack.c.l.b16 %v1778
    %v1972 = vunpack.c.h.b16 %v1778
    %v1973 = vunpack.c.l.b16 %v1779
    %v1974 = vunpack.c.h.b16 %v1779
    %v1975 = vunpack.c.l.b16 %v1780
    %v1976 = vunpack.c.h.b16 %v1780
    %v1977 = vunpack.c.l.b16 %v1781
    %v1978 = vunpack.c.h.b16 %v1781
    %v1979 = vunpack.c.l.b16 %v1782
    %v1980 = vunpack.c.h.b16 %v1782
    %v1981 = vpack.c.b16 %v1855, %v1853
    %v1982 = vpack.c.b16 %v1856, %v1854
    %v1983 = vpack.c.b16 %v1859, %v1857
    %v1984 = vpack.c.b16 %v1860, %v1858
    %v1985 = vpack.c.b16 %v1863, %v1861
    %v1986 = vpack.c.b16 %v1864, %v1862
    %v1987 = vpack.c.b16 %v1867, %v1865
    %v1988 = vpack.c.b16 %v1868, %v1866
    %v1989 = vpack.c.b16 %v1871, %v1869
    %v1990 = vpack.c.b16 %v1872, %v1870
    %v1991 = vpack.c.b16 %v1875, %v1873
    %v1992 = vpack.c.b16 %v1876, %v1874
    %v1993 = vpack.c.b16 %v1879, %v1877
    %v1994 = vpack.c.b16 %v1880, %v1878
    %v1995 = vpack.c.b16 %v1883, %v1881
    %v1996 = vpack.c.b16 %v1884, %v1882
    %v1997 = vpack.c.b16 %v1887, %v1885
    %v1998 = vpack.c.b16 %v1888, %v1886
    %v1999 = vpack.c.b16 %v1891, %v1889
    %v2000 = vpack.c.b16 %v1892, %v1890
    %v2001 = vpack.c.b16 %v1895, %v1893
    %v2002 = vpack.c.b16 %v1896, %v1894
    %v2003 = vpack.c.b16 %v1899, %v1897
    %v2004 = vpack.c.b16 %v1900, %v1898
    %v2005 = vpack.c.b16 %v1903, %v1901
    %v2006 = vpack.c.b16 %v1904, %v1902
    %v2007 = vpack.c.b16 %v1907, %v1905
    %v2008 = vpack.c.b16 %v1908, %v1906
    %v2009 = vpack.c.b16 %v1911, %v1909
    %v2010 = vpack.c.b16 %v1912, %v1910
    %v2011 = vpack.c.b16 %v1915, %v1913
    %v2012 = vpack.c.b16 %v1916, %v1914
    %v2013 = vpack.c.b16 %v1919, %v1917
    %v2014 = vpack.c.b16 %v1920, %v1918
    %v2015 = vpack.c.b16 %v1923, %v1921
    %v2016 = vpack.c.b16 %v1924, %v1922
    %v2017 = vpack.c.b16 %v1927, %v1925
    %v2018 = vpack.c.b16 %v1928, %v1926
    %v2019 = vpack.c.b16 %v1931, %v1929
    %v2020 = vpack.c.b16 %v1932, %v1930
    %v2021 = vpack.c.b16 %v1935, %v1933
    %v2022 = vpack.c.b16 %v1936, %v1934
    %v2023 = vpack.c.b16 %v1939, %v1937
    %v2024 = vpack.c.b16 %v1940, %v1938
    %v2025 = vpack.c.b16 %v1943, %v1941
    %v2026 = vpack.c.b16 %v1944, %v1942
    %v2027 = vpack.c.b16 %v1947, %v1945
    %v2028 = vpack.c.b16 %v1948, %v1946
    %v2029 = vpack.c.b16 %v1951, %v1949
    %v2030 = vpack.c.b16 %v1952, %v1950
    %v2031 = vpack.c.b16 %v1955, %v1953
    %v2032 = vpack.c.b16 %v1956, %v1954
    %v2033 = vpack.c.b16 %v1959, %v1957
    %v2034 = vpack.c.b16 %v1960, %v1958
    %v2035 = vpack.c.b16 %v1963, %v1961
    %v2036 = vpack.c.b16 %v1964, %v1962
    %v2037 = vpack.c.b16 %v1967, %v1965
    %v2038 = vpack.c.b16 %v1968, %v1966
    %v2039 = vpack.c.b16 %v1971, %v1969
    %v2040 = vpack.c.b16 %v1972, %v1970
    %v2041 = vpack.c.b16 %v1975, %v1973
    %v2042 = vpack.c.b16 %v1976, %v1974
    %v2043 = vpack.c.b16 %v1979, %v1977
    %v2044 = vpack.c.b16 %v1980, %v1978
    %2109 = vmatpush.bf16.msra.mxu0 %v1995
    %2110 = vmatpush.bf16.msra.mxu0 %v1993
    %2111 = vmatpush.bf16.msra.mxu0 %v1991
    %2112 = vmatpush.bf16.msra.mxu0 %v1989
    %2113 = vmatpush.bf16.msra.mxu0 %v1987
    %2114 = vmatpush.bf16.msra.mxu0 %v1985
    %2115 = vmatpush.bf16.msra.mxu0 %v1983
    %2116 = vmatpush.bf16.msra.mxu0 %v1981
    %2117 = vmatmul.bf16.gmra.mxu0 %v1715
    %v2118 = vpop.f32.mrf.mxu0
    %v2119 = vadd.f32 %v1785, %v2118
    %v2120 = vpop.f32.mrf.mxu0
    %v2121 = vadd.f32 %v1785, %v2120
    %2122 = vdwg.mxu0
    %2123 = vmatpush.bf16.msra.mxu0 %v2011
    %2124 = vmatpush.bf16.msra.mxu0 %v2009
    %2125 = vmatpush.bf16.msra.mxu0 %v2007
    %2126 = vmatpush.bf16.msra.mxu0 %v2005
    %2127 = vmatpush.bf16.msra.mxu0 %v2003
    %2128 = vmatpush.bf16.msra.mxu0 %v2001
    %2129 = vmatpush.bf16.msra.mxu0 %v1999
    %2130 = vmatpush.bf16.msra.mxu0 %v1997
    %2131 = vmatmul.bf16.gmra.mxu0 %v1716
    %v2132 = vpop.f32.mrf.mxu0
    %v2133 = vadd.f32 %v2119, %v2132
    %v2134 = vpop.f32.mrf.mxu0
    %v2135 = vadd.f32 %v2121, %v2134
    %2136 = vdwg.mxu0
    %2137 = vmatpush.bf16.msra.mxu0 %v2027
    %2138 = vmatpush.bf16.msra.mxu0 %v2025
    %2139 = vmatpush.bf16.msra.mxu0 %v2023
    %2140 = vmatpush.bf16.msra.mxu0 %v2021
    %2141 = vmatpush.bf16.msra.mxu0 %v2019
    %2142 = vmatpush.bf16.msra.mxu0 %v2017
    %2143 = vmatpush.bf16.msra.mxu0 %v2015
    %2144 = vmatpush.bf16.msra.mxu0 %v2013
    %2145 = vmatmul.bf16.gmra.mxu0 %v1717
    %v2146 = vpop.f32.mrf.mxu0
    %v2147 = vadd.f32 %v2133, %v2146
    %v2148 = vpop.f32.mrf.mxu0
    %v2149 = vadd.f32 %v2135, %v2148
    %2150 = vdwg.mxu0
    %2151 = vmatpush.bf16.msra.mxu0 %v2043
    %2152 = vmatpush.bf16.msra.mxu0 %v2041
    %2153 = vmatpush.bf16.msra.mxu0 %v2039
    %2154 = vmatpush.bf16.msra.mxu0 %v2037
    %2155 = vmatpush.bf16.msra.mxu0 %v2035
    %2156 = vmatpush.bf16.msra.mxu0 %v2033
    %2157 = vmatpush.bf16.msra.mxu0 %v2031
    %2158 = vmatpush.bf16.msra.mxu0 %v2029
    %2159 = vmatmul.bf16.gmra.mxu0 %v1718
    %v2160 = vpop.f32.mrf.mxu0
    %v2161 = vadd.f32 %v2147, %v2160
    %v2162 = vpop.f32.mrf.mxu0
    %v2163 = vadd.f32 %v2149, %v2162
    %2164 = vdwg.mxu0
    %2165 = vmatpush.bf16.msra.mxu0 %v1996
    %2166 = vmatpush.bf16.msra.mxu0 %v1994
    %2167 = vmatpush.bf16.msra.mxu0 %v1992
    %2168 = vmatpush.bf16.msra.mxu0 %v1990
    %2169 = vmatpush.bf16.msra.mxu0 %v1988
    %2170 = vmatpush.bf16.msra.mxu0 %v1986
    %2171 = vmatpush.bf16.msra.mxu0 %v1984
    %2172 = vmatpush.bf16.msra.mxu0 %v1982
    %2173 = vmatmul.bf16.gmra.mxu0 %v1715
    %v2174 = vpop.f32.mrf.mxu0
    %v2175 = vadd.f32 %v1786, %v2174
    %v2176 = vpop.f32.mrf.mxu0
    %v2177 = vadd.f32 %v1786, %v2176
    %2178 = vdwg.mxu0
    %2179 = vmatpush.bf16.msra.mxu0 %v2012
    %2180 = vmatpush.bf16.msra.mxu0 %v2010
    %2181 = vmatpush.bf16.msra.mxu0 %v2008
    %2182 = vmatpush.bf16.msra.mxu0 %v2006
    %2183 = vmatpush.bf16.msra.mxu0 %v2004
    %2184 = vmatpush.bf16.msra.mxu0 %v2002
    %2185 = vmatpush.bf16.msra.mxu0 %v2000
    %2186 = vmatpush.bf16.msra.mxu0 %v1998
    %2187 = vmatmul.bf16.gmra.mxu0 %v1716
    %v2188 = vpop.f32.mrf.mxu0
    %v2189 = vadd.f32 %v2175, %v2188
    %v2190 = vpop.f32.mrf.mxu0
    %v2191 = vadd.f32 %v2177, %v2190
    %2192 = vdwg.mxu0
    %2193 = vmatpush.bf16.msra.mxu0 %v2028
    %2194 = vmatpush.bf16.msra.mxu0 %v2026
    %2195 = vmatpush.bf16.msra.mxu0 %v2024
    %2196 = vmatpush.bf16.msra.mxu0 %v2022
    %2197 = vmatpush.bf16.msra.mxu0 %v2020
    %2198 = vmatpush.bf16.msra.mxu0 %v2018
    %2199 = vmatpush.bf16.msra.mxu0 %v2016
    %2200 = vmatpush.bf16.msra.mxu0 %v2014
    %2201 = vmatmul.bf16.gmra.mxu0 %v1717
    %v2202 = vpop.f32.mrf.mxu0
    %v2203 = vadd.f32 %v2189, %v2202
    %v2204 = vpop.f32.mrf.mxu0
    %v2205 = vadd.f32 %v2191, %v2204
    %2206 = vdwg.mxu0
    %2207 = vmatpush.bf16.msra.mxu0 %v2044
    %2208 = vmatpush.bf16.msra.mxu0 %v2042
    %2209 = vmatpush.bf16.msra.mxu0 %v2040
    %2210 = vmatpush.bf16.msra.mxu0 %v2038
    %2211 = vmatpush.bf16.msra.mxu0 %v2036
    %2212 = vmatpush.bf16.msra.mxu0 %v2034
    %2213 = vmatpush.bf16.msra.mxu0 %v2032
    %2214 = vmatpush.bf16.msra.mxu0 %v2030
    %2215 = vmatmul.bf16.gmra.mxu0 %v1718
    %v2216 = vpop.f32.mrf.mxu0
    %v2217 = vadd.f32 %v2203, %v2216
    %v2218 = vpop.f32.mrf.mxu0
    %v2219 = vadd.f32 %v2205, %v2218
    %2220 = vdwg.mxu0
    %v2221 = vmax.f32 %v2161, 0.0
    %v2222 = vmax.f32 %v2217, 0.0
    %v2223 = vmax.f32 %v2163, 0.0
    %v2224 = vmax.f32 %v2219, 0.0
    %v2225 = vpack.c.bf16 %v2223, %v2221
    %v2226 = vpack.c.bf16 %v2224, %v2222
    %v2227 = vld [vmem:[#allocation10] sm:$0xf]
    %v2228 = vld [vmem:[#allocation10 + $0x4] sm:$0xf]
    %v2229 = vld [vmem:[#allocation10 + $0x8] sm:$0xf]
    %v2230 = vld [vmem:[#allocation10 + $0xc] sm:$0xf]
    %v2231 = vld [vmem:[#allocation10 + $0x10] sm:$0xf]
    %v2232 = vld [vmem:[#allocation10 + $0x14] sm:$0xf]
    %v2233 = vld [vmem:[#allocation10 + $0x18] sm:$0xf]
    %v2234 = vld [vmem:[#allocation10 + $0x1c] sm:$0xf]
    %v2235 = vld [vmem:[#allocation10 + $0x20] sm:$0xf]
    %v2236 = vld [vmem:[#allocation10 + $0x24] sm:$0xf]
    %v2237 = vld [vmem:[#allocation10 + $0x28] sm:$0xf]
    %v2238 = vld [vmem:[#allocation10 + $0x2c] sm:$0xf]
    %v2239 = vld [vmem:[#allocation10 + $0x30] sm:$0xf]
    %v2240 = vld [vmem:[#allocation10 + $0x34] sm:$0xf]
    %v2241 = vld [vmem:[#allocation10 + $0x38] sm:$0xf]
    %v2242 = vld [vmem:[#allocation10 + $0x3c] sm:$0xf]
    %v2243 = vld [vmem:[#allocation10 + $0x40] sm:$0xf]
    %v2244 = vld [vmem:[#allocation10 + $0x44] sm:$0xf]
    %v2245 = vld [vmem:[#allocation10 + $0x48] sm:$0xf]
    %v2246 = vld [vmem:[#allocation10 + $0x4c] sm:$0xf]
    %v2247 = vld [vmem:[#allocation10 + $0x50] sm:$0xf]
    %v2248 = vld [vmem:[#allocation10 + $0x54] sm:$0xf]
    %v2249 = vld [vmem:[#allocation10 + $0x58] sm:$0xf]
    %v2250 = vld [vmem:[#allocation10 + $0x5c] sm:$0xf]
    %v2251 = vld [vmem:[#allocation10 + $0x60] sm:$0xf]
    %v2252 = vld [vmem:[#allocation10 + $0x64] sm:$0xf]
    %v2253 = vld [vmem:[#allocation10 + $0x68] sm:$0xf]
    %v2254 = vld [vmem:[#allocation10 + $0x6c] sm:$0xf]
    %v2255 = vld [vmem:[#allocation10 + $0x70] sm:$0xf]
    %v2256 = vld [vmem:[#allocation10 + $0x74] sm:$0xf]
    %v2257 = vld [vmem:[#allocation10 + $0x78] sm:$0xf]
    %v2258 = vld [vmem:[#allocation10 + $0x7c] sm:$0xf]
    %v2259 = vld [vmem:[%s6] sm:$0x1]
    %v2261 = vperm.slane %v2259, 0
    %v2295 = vunpack.c.l.b16 %v2227
    %v2296 = vunpack.c.l.b16 %v2228
    %v2297 = vunpack.c.l.b16 %v2229
    %v2298 = vunpack.c.l.b16 %v2230
    %v2299 = vunpack.c.l.b16 %v2231
    %v2300 = vunpack.c.l.b16 %v2232
    %v2301 = vunpack.c.l.b16 %v2233
    %v2302 = vunpack.c.l.b16 %v2234
    %v2303 = vunpack.c.l.b16 %v2235
    %v2304 = vunpack.c.l.b16 %v2236
    %v2305 = vunpack.c.l.b16 %v2237
    %v2306 = vunpack.c.l.b16 %v2238
    %v2307 = vunpack.c.l.b16 %v2239
    %v2308 = vunpack.c.l.b16 %v2240
    %v2309 = vunpack.c.l.b16 %v2241
    %v2310 = vunpack.c.l.b16 %v2242
    %v2311 = vunpack.c.l.b16 %v2243
    %v2312 = vunpack.c.l.b16 %v2244
    %v2313 = vunpack.c.l.b16 %v2245
    %v2314 = vunpack.c.l.b16 %v2246
    %v2315 = vunpack.c.l.b16 %v2247
    %v2316 = vunpack.c.l.b16 %v2248
    %v2317 = vunpack.c.l.b16 %v2249
    %v2318 = vunpack.c.l.b16 %v2250
    %v2319 = vunpack.c.l.b16 %v2251
    %v2320 = vunpack.c.l.b16 %v2252
    %v2321 = vunpack.c.l.b16 %v2253
    %v2322 = vunpack.c.l.b16 %v2254
    %v2323 = vunpack.c.l.b16 %v2255
    %v2324 = vunpack.c.l.b16 %v2256
    %v2325 = vunpack.c.l.b16 %v2257
    %v2326 = vunpack.c.l.b16 %v2258
    %v2327 = vpack.c.b16 %v2296, %v2295
    %v2328 = vpack.c.b16 %v2298, %v2297
    %v2329 = vpack.c.b16 %v2300, %v2299
    %v2330 = vpack.c.b16 %v2302, %v2301
    %v2331 = vpack.c.b16 %v2304, %v2303
    %v2332 = vpack.c.b16 %v2306, %v2305
    %v2333 = vpack.c.b16 %v2308, %v2307
    %v2334 = vpack.c.b16 %v2310, %v2309
    %v2335 = vpack.c.b16 %v2312, %v2311
    %v2336 = vpack.c.b16 %v2314, %v2313
    %v2337 = vpack.c.b16 %v2316, %v2315
    %v2338 = vpack.c.b16 %v2318, %v2317
    %v2339 = vpack.c.b16 %v2320, %v2319
    %v2340 = vpack.c.b16 %v2322, %v2321
    %v2341 = vpack.c.b16 %v2324, %v2323
    %v2342 = vpack.c.b16 %v2326, %v2325
    %2359 = vmatpush.bf16.msra.mxu0 %v2334
    %2360 = vmatpush.bf16.msra.mxu0 %v2333
    %2361 = vmatpush.bf16.msra.mxu0 %v2332
    %2362 = vmatpush.bf16.msra.mxu0 %v2331
    %2363 = vmatpush.bf16.msra.mxu0 %v2330
    %2364 = vmatpush.bf16.msra.mxu0 %v2329
    %2365 = vmatpush.bf16.msra.mxu0 %v2328
    %2366 = vmatpush.bf16.msra.mxu0 %v2327
    %2367 = vmatmul.bf16.gmra.mxu0 %v2225
    %v2368 = vpop.f32.mrf.mxu0
    %v2369 = vadd.f32 %v2261, %v2368
    %v2370 = vpop.f32.mrf.mxu0
    %v2371 = vadd.f32 %v2261, %v2370
    %2372 = vdwg.mxu0
    %2373 = vmatpush.bf16.msra.mxu0 %v2342
    %2374 = vmatpush.bf16.msra.mxu0 %v2341
    %2375 = vmatpush.bf16.msra.mxu0 %v2340
    %2376 = vmatpush.bf16.msra.mxu0 %v2339
    %2377 = vmatpush.bf16.msra.mxu0 %v2338
    %2378 = vmatpush.bf16.msra.mxu0 %v2337
    %2379 = vmatpush.bf16.msra.mxu0 %v2336
    %2380 = vmatpush.bf16.msra.mxu0 %v2335
    %2381 = vmatmul.bf16.gmra.mxu0 %v2226
    %v2382 = vpop.f32.mrf.mxu0
    %v2383 = vadd.f32 %v2369, %v2382
    %v2384 = vpop.f32.mrf.mxu0
    %v2385 = vadd.f32 %v2371, %v2384
    %2386 = vdwg.mxu0
    %v2387 = vpack.c.bf16 %v2383, %v2383
    %v2388 = vpack.c.bf16 %v2385, %v2385
    %2389 = vst [vmem:[#allocation11] sm:$0xf] %v2387
    %2390 = vst [vmem:[#allocation11 + $0x4] sm:$0xf] %v2388
    // Predicated region
    $region50: #{tpu_custom_call.1} parent=1 // pred_check
      _
    $region51: #{tpu_custom_call.1} parent=1 // pred_check_branch
      %2392 = sbr.rel (0) target = $region53
    $region52: #{tpu_custom_call.1} parent=1 // pred_region
      %2394 = vsyncadd [#allocation4], 0
      %s2395 = sshll.u32 [#allocation11], 4
      %s2396 = int_to_ptr.vmem [resolvable:$true] %s2395
      %s2397 = sshll.u32 %s7, 4
      %s2398 = int_to_ptr.hbm [resolvable:$true] %s2397
      %2403 = dma.vmem_to_hbm [thread:$0]  %s2396, 128, %s2398, [#allocation4], 64, 64, 4
    $region53: #{tpu_custom_call.1} parent=1 // pred_fallthru
      _
    // Predicated region
    $region54: #{tpu_custom_call.1} parent=1 // pred_check
      _
    $region55: #{tpu_custom_call.1} parent=1 // pred_check_branch
      %2405 = sbr.rel (0) target = $region57
    $region56: #{tpu_custom_call.1} parent=1 // pred_region
      %2407 = dma.done [#allocation4], 128
    $region57: #{tpu_custom_call.1} parent=1 // pred_fallthru
      _
    %2408 = vsyncpa [#allocation3], 1
    %2409 = vsyncpa [#allocation6], 1
    %2410 = vsyncpa [#allocation9], 1
    %2411 = vsyncpa [#allocation4], 1

</llo_original>
